<compile_context>
chip_gen: v5e
topology: v5e:2x2
jax: 0.10.0
libtpu: 0.0.40
codegen_flags: <defaults>
</compile_context>

<pallas_src>
import functools

import jax
import jax.numpy as jnp
from jax import lax
from jax.experimental import pallas as pl
from jax.experimental.pallas import tpu as pltpu


_LN_EPS = 1e-5  # PyTorch nn.LayerNorm / TransformerEncoderLayer default


# ----------------------------- in-kernel helpers ----------------------------

def _layernorm(x, w, b):
    # per-row LayerNorm over the last (feature) axis, biased variance (matches PyTorch)
    mu = jnp.mean(x, axis=-1, keepdims=True)
    xc = x - mu
    var = jnp.mean(xc * xc, axis=-1, keepdims=True)
    return xc * lax.rsqrt(var + _LN_EPS) * w + b


def _mha(q_src, kv_src, w_qkv, b_qkv, w_o, b_o, *, nheads, need_attn, self_kv):
    """torch.nn.MultiheadAttention forward on 2-D (seq, D) operands (one batch element).

    w_qkv: (D, 3D) already transposed for x @ W, [q|k|v] concatenated along the output dim.
    b_qkv: (1, 3D), w_o: (D, D), b_o: (1, D).
    Returns (out:(Tq, D), attn:(Tq, Tk) averaged over heads, or None).
    """
    Tq, D = q_src.shape
    dh = D // nheads
    scale = 1.0 / float(dh) ** 0.5

    if self_kv:
        # one fused QKV matmul
        qkv = jnp.dot(q_src, w_qkv, preferred_element_type=jnp.float32) + b_qkv
        q, k, v = qkv[:, 0:D], qkv[:, D:2 * D], qkv[:, 2 * D:3 * D]
    else:
        q = jnp.dot(q_src, w_qkv[:, 0:D], preferred_element_type=jnp.float32) + b_qkv[:, 0:D]
        kv = jnp.dot(kv_src, w_qkv[:, D:3 * D], preferred_element_type=jnp.float32) + b_qkv[:, D:3 * D]
        k, v = kv[:, 0:D], kv[:, D:2 * D]

    heads = []
    attn_sum = None
    for h in range(nheads):                               # static unroll; data stays in vregs
        lo, hi = h * dh, (h + 1) * dh
        s = lax.dot_general(q[:, lo:hi], k[:, lo:hi], (((1,), (1,)), ((), ())),
                            preferred_element_type=jnp.float32) * scale      # (Tq, Tk)
        m = jnp.max(s, axis=-1, keepdims=True)
        e = jnp.exp(s - m)
        p = e / jnp.sum(e, axis=-1, keepdims=True)                            # exact softmax
        heads.append(jnp.dot(p, v[:, lo:hi], preferred_element_type=jnp.float32))
        if need_attn:
            attn_sum = p if attn_sum is None else attn_sum + p
    # lane-concat head outputs, single output projection matmul
    o = jnp.dot(jnp.concatenate(heads, axis=-1), w_o,
                preferred_element_type=jnp.float32) + b_o
    attn = attn_sum * (1.0 / nheads) if need_attn else None
    return o, attn


# --------------------------- fused full-BoQ kernel ---------------------------

def _boq_fused_kernel(x_ref, nin_ref, w_ref, ff2_ref, bia_ref, qry_ref,
                      fcw_ref, fcb_ref, w2_ref, fc2b_ref,
                      head_ref, attn_ref,
                      x_scr, y_scr,
                      *, nheads):
    D = x_ref.shape[2]
    l = pl.program_id(1)
    n_blocks = pl.num_programs(1)

    def w(lo, hi):        # (D, hi-lo) slice of this block's weight slab
        return w_ref[0, :, lo:hi]

    def bv(lo, hi):       # (1, hi-lo) slice of this block's bias/LN slab
        return bia_ref[0, :, lo:hi]

    # ---- first block: fuse BoQ.norm_input; zero the head's fc accumulator for this batch elem ----
    @pl.when(l == 0)
    def _():
        x_scr[...] = _layernorm(x_ref[0], nin_ref[0:1, :], nin_ref[1:2, :])
        y_scr[...] = jnp.zeros_like(y_scr)

    x = x_scr[...]                                        # (N, D), carried in VMEM across blocks

    # ---- TransformerEncoderLayer (post-norm, ReLU, dropout=0) ----
    sa, _ = _mha(x, x, w(0, 3 * D), bv(0, 3 * D), w(3 * D, 4 * D), bv(3 * D, 4 * D),
                 nheads=nheads, need_attn=False, self_kv=True)
    x = _layernorm(x + sa, bv(4 * D, 5 * D), bv(5 * D, 6 * D))
    h = jnp.dot(x, w(4 * D, 8 * D), preferred_element_type=jnp.float32) + bv(6 * D, 10 * D)
    h = jnp.maximum(h, 0.0)
    ff = jnp.dot(h, ff2_ref[0], preferred_element_type=jnp.float32) + bv(10 * D, 11 * D)
    x = _layernorm(x + ff, bv(11 * D, 12 * D), bv(12 * D, 13 * D))
    x_scr[...] = x                                        # carry to the next block (no HBM trip)

    # ---- cross attention: precomputed (batch-invariant) queries attend over encoded tokens ----
    q = qry_ref[0]                                        # (Q, D), already self-attn'd + norm_q'd
    o, attn = _mha(q, x, w(8 * D, 11 * D), bv(13 * D, 16 * D),
                   w(11 * D, 12 * D), bv(16 * D, 17 * D),
                   nheads=nheads, need_attn=True, self_kv=False)
    out_l = _layernorm(o, bv(17 * D, 18 * D), bv(18 * D, 19 * D))
    attn_ref[0, 0] = attn

    # ---- fused head: accumulate this block's fc contribution, finish at the last block ----
    # y[r, d] = sum_{l,q} fc_w[l*Q + q, r] * out_l[q, d]  (== fc(cat(outs).permute(0,2,1)), transposed)
    y_scr[...] += jnp.dot(fcw_ref[0], out_l, preferred_element_type=jnp.float32)

    @pl.when(l == n_blocks - 1)
    def _():
        y = y_scr[...] + fcb_ref[...]                     # (row, D)
        z = fc2b_ref[...]                                 # (1, Dout)
        for r in range(w2_ref.shape[0]):                  # row is tiny & static
            z = z + jnp.dot(y[r:r + 1, :], w2_ref[r], preferred_element_type=jnp.float32)
        # F.normalize(p=2, dim=-1): x / max(||x||, 1e-12) == x * rsqrt(max(||x||^2, 1e-24))
        n2 = jnp.sum(z * z, axis=-1, keepdims=True)
        head_ref[0] = z * lax.rsqrt(jnp.maximum(n2, 1e-24))


# ------------------- plain-JAX glue for the batch-invariant part -------------------

def _layernorm_jax(x, w, b):
    mu = jnp.mean(x, axis=-1, keepdims=True)
    var = jnp.mean((x - mu) ** 2, axis=-1, keepdims=True)
    return (x - mu) * lax.rsqrt(var + _LN_EPS) * w + b


def _mha_jax(x, w_qkv, b_qkv, w_o, b_o, nheads):
    """Plain-JAX self-attention; only used for the tiny batch-invariant learned-query branch."""
    T, D = x.shape
    dh = D // nheads
    qkv = x @ w_qkv + b_qkv
    q, k, v = qkv[:, 0:D], qkv[:, D:2 * D], qkv[:, 2 * D:3 * D]
    q = q.reshape(T, nheads, dh).transpose(1, 0, 2)
    k = k.reshape(T, nheads, dh).transpose(1, 0, 2)
    v = v.reshape(T, nheads, dh).transpose(1, 0, 2)
    s = jnp.einsum('hqd,hkd->hqk', q, k) * (1.0 / float(dh) ** 0.5)
    p = jax.nn.softmax(s, axis=-1)
    o = jnp.einsum('hqk,hkd->hqd', p, v).transpose(1, 0, 2).reshape(T, D)
    return o @ w_o + b_o


# ------------------------------- BoQ forward ---------------------------------

def boq_forward(params, x, nheads):
    B, C, H, W = x.shape
    N = H * W
    D = C
    x = x.reshape(B, C, N).transpose(0, 2, 1)     # == x.flatten(2).permute(0, 2, 1) -> (B, N, D)

    blocks = params['blocks']
    L = len(blocks)
    Q = blocks[0]['queries'].shape[0]
    row = params['fc_w'].shape[1]
    Dout = params['fc2_w'].shape[1]

    # ---- pack per-block params into L-stacked slabs (few operands -> few DMA descriptors) ----
    w_stack = jnp.stack([jnp.concatenate([bp['enc_wqkv'], bp['enc_wo'], bp['enc_ff1_w'],
                                          bp['cross_wqkv'], bp['cross_wo']], axis=1)
                         for bp in blocks])                                        # (L, D, 12D)
    b_stack = jnp.stack([jnp.concatenate([bp['enc_bqkv'], bp['enc_bo'],
                                          bp['enc_n1_w'], bp['enc_n1_b'],
                                          bp['enc_ff1_b'], bp['enc_ff2_b'],
                                          bp['enc_n2_w'], bp['enc_n2_b'],
                                          bp['cross_bqkv'], bp['cross_bo'],
                                          bp['no_w'], bp['no_b']], axis=1)
                         for bp in blocks])                                        # (L, 1, 19D)
    ff2_stack = jnp.stack([bp['enc_ff2_w'] for bp in blocks])                      # (L, 4D, D)

    # ---- hoist the batch-invariant learned-query branch (queries self-attn + norm_q) ----
    qproc = jnp.stack([
        _layernorm_jax(bp['queries'] + _mha_jax(bp['queries'], bp['self_wqkv'], bp['self_bqkv'],
                                                bp['self_wo'], bp['self_bo'], nheads),
                       bp['nq_w'], bp['nq_b'])
        for bp in blocks])                                                          # (L, Q, D)

    norm_in = jnp.concatenate([params['norm_in_w'], params['norm_in_b']], axis=0)  # (2, D)

    # head weights, pre-laid-out for the fused in-kernel head
    fcw_t = params['fc_w'].reshape(L, Q, row).transpose(0, 2, 1)                   # (L, row, Q)
    fcb_col = params['fc_b'].reshape(row, 1)                                       # (row, 1)
    w2 = params['fc2_w'].reshape(D, row, Dout).transpose(1, 0, 2)                  # (row, D, Dout)
    fc2_b = params['fc2_b']                                                        # (1, Dout)

    full = lambda a: pl.BlockSpec(a.shape, lambda b, l, _z=(0,) * a.ndim: _z)
    per_l = lambda a: pl.BlockSpec((1,) + a.shape[1:],
                                   lambda b, l, _nd=a.ndim: (l,) + (0,) * (_nd - 1))

    head, attn = pl.pallas_call(
        functools.partial(_boq_fused_kernel, nheads=nheads),
        grid=(B, L),
        in_specs=[
            pl.BlockSpec((1, N, D), lambda b, l: (b, 0, 0)),         # x, per batch element
            full(norm_in),
            per_l(w_stack), per_l(ff2_stack), per_l(b_stack), per_l(qproc), per_l(fcw_t),
            full(fcb_col), full(w2), full(fc2_b),
        ],
        out_specs=(
            pl.BlockSpec((1, 1, Dout), lambda b, l: (b, 0, 0)),      # head (written at l==L-1)
            pl.BlockSpec((1, 1, Q, N), lambda b, l: (b, l, 0, 0)),   # cross-attn weights
        ),
        out_shape=(
            jax.ShapeDtypeStruct((B, 1, Dout), jnp.float32),
            jax.ShapeDtypeStruct((B, L, Q, N), jnp.float32),
        ),
        scratch_shapes=[
            pltpu.VMEM((N, D), jnp.float32),      # encoded tokens, carried across blocks
            pltpu.VMEM((row, D), jnp.float32),    # running fc accumulator for the head
        ],
        compiler_params=pltpu.CompilerParams(
            dimension_semantics=("parallel", "arbitrary")),  # B across v7x TCs; L sequential
    )(x, norm_in, w_stack, ff2_stack, b_stack, qproc, fcw_t, fcb_col, w2, fc2_b)

    out = head[:, 0, :]
    attns = [attn[:, i] for i in range(L)]
    return out, attns


# ----------------------------- parameter init --------------------------------
# Mapping from PyTorch: nn.MultiheadAttention.in_proj_weight (3D, D) is pre-transposed to (D, 3D);
# out_proj.weight (D, D), Linear weights (out, in) are pre-transposed for the x @ W convention.

def _normal(key, shape, scale=0.02):
    return scale * jax.random.normal(key, shape, dtype=jnp.float32)


def init_mha(key, D):
    ks = jax.random.split(key, 2)
    return dict(wqkv=_normal(ks[0], (D, 3 * D)), bqkv=jnp.zeros((1, 3 * D), jnp.float32),
                wo=_normal(ks[1], (D, D)), bo=jnp.zeros((1, D), jnp.float32))


def init_block(key, D, num_queries):
    ks = jax.random.split(key, 6)
    ones = lambda: jnp.ones((1, D), jnp.float32)
    zeros = lambda: jnp.zeros((1, D), jnp.float32)
    enc = init_mha(ks[0], D)
    sa = init_mha(ks[1], D)
    ca = init_mha(ks[2], D)
    return dict(
        enc_wqkv=enc['wqkv'], enc_bqkv=enc['bqkv'], enc_wo=enc['wo'], enc_bo=enc['bo'],
        enc_n1_w=ones(), enc_n1_b=zeros(),
        enc_ff1_w=_normal(ks[3], (D, 4 * D)), enc_ff1_b=jnp.zeros((1, 4 * D), jnp.float32),
        enc_ff2_w=_normal(ks[4], (4 * D, D)), enc_ff2_b=zeros(),
        enc_n2_w=ones(), enc_n2_b=zeros(),
        queries=jax.random.normal(ks[5], (num_queries, D), dtype=jnp.float32),
        self_wqkv=sa['wqkv'], self_bqkv=sa['bqkv'], self_wo=sa['wo'], self_bo=sa['bo'],
        nq_w=ones(), nq_b=zeros(),
        cross_wqkv=ca['wqkv'], cross_bqkv=ca['bqkv'], cross_wo=ca['wo'], cross_bo=ca['bo'],
        no_w=ones(), no_b=zeros(),
    )


def init_boq(key, proj_channels, num_queries, num_layers, row_dim):
    D = proj_channels
    ks = jax.random.split(key, num_layers + 2)
    return dict(
        norm_in_w=jnp.ones((1, D), jnp.float32),
        norm_in_b=jnp.zeros((1, D), jnp.float32),
        blocks=[init_block(ks[i], D, num_queries) for i in range(num_layers)],
        fc_w=_normal(ks[-2], (num_layers * num_queries, row_dim)),
        fc_b=jnp.zeros((1, row_dim), jnp.float32),
        fc2_w=_normal(ks[-1], (D * row_dim, D)),     # fc2_type == 1 (plain Linear)
        fc2_b=jnp.zeros((1, D), jnp.float32),
    )


# ---------------------------------- main -------------------------------------

if __name__ == "__main__":
    # cfg: proj_channels=32, num_queries=8, num_layers=2, nheads_base_dim=8 -> nheads=4,
    #      row_dim=4, fc2_type=1
    proj_channels, num_queries, num_layers, nheads_base_dim, row_dim = 32, 8, 2, 8, 4
    nheads = proj_channels // nheads_base_dim

    key = jax.random.PRNGKey(0)
    kx, kp = jax.random.split(key)
    x = jax.random.normal(kx, (2, proj_channels, 4, 4), dtype=jnp.float32)  # NCHW

    params = init_boq(kp, proj_channels, num_queries, num_layers, row_dim)

    fwd = jax.jit(functools.partial(boq_forward, nheads=nheads))
    out, attns = fwd(params, x)
    jax.block_until_ready((out, attns))

    assert out.shape == (2, proj_channels)
    assert len(attns) == num_layers
    assert attns[0].shape == (2, num_queries, 16)
    print("KERNEL_OK")
</pallas_src>

<mosaic_0001>
module attributes {stable_mosaic.version = 11 : i64} {
  func.func @_boq_fused_kernel(%arg0: i32, %arg1: i32, %arg2: memref<1x16x32xf32, #tpu.memory_space<vmem>>, %arg3: memref<2x32xf32, #tpu.memory_space<vmem>>, %arg4: memref<1x32x384xf32, #tpu.memory_space<vmem>>, %arg5: memref<1x128x32xf32, #tpu.memory_space<vmem>>, %arg6: memref<1x1x608xf32, #tpu.memory_space<vmem>>, %arg7: memref<1x8x32xf32, #tpu.memory_space<vmem>>, %arg8: memref<1x4x8xf32, #tpu.memory_space<vmem>>, %arg9: memref<4x1xf32, #tpu.memory_space<vmem>>, %arg10: memref<4x32x32xf32, #tpu.memory_space<vmem>>, %arg11: memref<1x32xf32, #tpu.memory_space<vmem>>, %arg12: memref<1x1x32xf32, #tpu.memory_space<vmem>>, %arg13: memref<1x1x8x16xf32, #tpu.memory_space<vmem>>, %arg14: memref<16x32xf32, #tpu.memory_space<vmem>>, %arg15: memref<4x32xf32, #tpu.memory_space<vmem>>) attributes {dimension_semantics = [#tpu.dimension_semantics<parallel>, #tpu.dimension_semantics<arbitrary>], iteration_bounds = array<i64: 2, 2>, scalar_prefetch = 0 : i64, scratch_operands = 2 : i64, tpu.core_type = #tpu.core_type<tc>, window_params = [{transform_indices = @transform_0, window_bounds = array<i64: 1, 16, 32>}, {pipeline_mode = #tpu.pipeline_mode<synchronous>, transform_indices = @transform_1, window_bounds = array<i64: 2, 32>}, {transform_indices = @transform_2, window_bounds = array<i64: 1, 32, 384>}, {transform_indices = @transform_3, window_bounds = array<i64: 1, 128, 32>}, {transform_indices = @transform_4, window_bounds = array<i64: 1, 1, 608>}, {transform_indices = @transform_5, window_bounds = array<i64: 1, 8, 32>}, {transform_indices = @transform_6, window_bounds = array<i64: 1, 4, 8>}, {pipeline_mode = #tpu.pipeline_mode<synchronous>, transform_indices = @transform_7, window_bounds = array<i64: 4, 1>}, {pipeline_mode = #tpu.pipeline_mode<synchronous>, transform_indices = @transform_8, window_bounds = array<i64: 4, 32, 32>}, {pipeline_mode = #tpu.pipeline_mode<synchronous>, transform_indices = @transform_9, window_bounds = array<i64: 1, 32>}, {transform_indices = @transform_10, window_bounds = array<i64: 1, 1, 32>}, {transform_indices = @transform_11, window_bounds = array<i64: 1, 1, 8, 16>}]} {
    %c0_i32 = arith.constant 0 : i32
    %0 = arith.cmpi eq, %arg1, %c0_i32 : i32
    %1 = arith.extui %0 : i1 to i32
    %c0_i32_0 = arith.constant 0 : i32
    %2 = arith.cmpi ne, %1, %c0_i32_0 : i32
    scf.if %2 {
      %c0_125 = arith.constant 0 : index
      %c0_126 = arith.constant 0 : index
      %c0_127 = arith.constant 0 : index
      %284 = vector.load %arg2[%c0_125, %c0_126, %c0_127] : memref<1x16x32xf32, #tpu.memory_space<vmem>>, vector<1x16x32xf32>
      %285 = vector.shape_cast %284 : vector<1x16x32xf32> to vector<16x32xf32>
      %c0_128 = arith.constant 0 : index
      %c0_129 = arith.constant 0 : index
      %286 = vector.load %arg3[%c0_128, %c0_129] : memref<2x32xf32, #tpu.memory_space<vmem>>, vector<1x32xf32>
      %c1 = arith.constant 1 : index
      %c0_130 = arith.constant 0 : index
      %287 = vector.load %arg3[%c1, %c0_130] : memref<2x32xf32, #tpu.memory_space<vmem>>, vector<1x32xf32>
      %cst_131 = arith.constant dense<0.000000e+00> : vector<16xf32>
      %288 = vector.multi_reduction <add>, %285, %cst_131 [1] : vector<16x32xf32> to vector<16xf32>
      %289 = vector.shape_cast %288 : vector<16xf32> to vector<16x1xf32>
      %cst_132 = arith.constant 3.200000e+01 : f32
      %290 = vector.broadcast %cst_132 : f32 to vector<16x1xf32>
      %291 = arith.divf %289, %290 : vector<16x1xf32>
      %292 = vector.broadcast %291 : vector<16x1xf32> to vector<16x32xf32>
      %293 = arith.subf %285, %292 : vector<16x32xf32>
      %294 = arith.mulf %293, %293 : vector<16x32xf32>
      %cst_133 = arith.constant dense<0.000000e+00> : vector<16xf32>
      %295 = vector.multi_reduction <add>, %294, %cst_133 [1] : vector<16x32xf32> to vector<16xf32>
      %296 = vector.shape_cast %295 : vector<16xf32> to vector<16x1xf32>
      %cst_134 = arith.constant 3.200000e+01 : f32
      %297 = vector.broadcast %cst_134 : f32 to vector<16x1xf32>
      %298 = arith.divf %296, %297 : vector<16x1xf32>
      %cst_135 = arith.constant 9.99999974E-6 : f32
      %299 = vector.broadcast %cst_135 : f32 to vector<16x1xf32>
      %300 = arith.addf %298, %299 : vector<16x1xf32>
      %301 = math.rsqrt %300 : vector<16x1xf32>
      %302 = vector.broadcast %301 : vector<16x1xf32> to vector<16x32xf32>
      %303 = arith.mulf %293, %302 : vector<16x32xf32>
      %304 = vector.broadcast %286 : vector<1x32xf32> to vector<16x32xf32>
      %305 = arith.mulf %303, %304 : vector<16x32xf32>
      %306 = vector.broadcast %287 : vector<1x32xf32> to vector<16x32xf32>
      %307 = arith.addf %305, %306 : vector<16x32xf32>
      %c0_136 = arith.constant 0 : index
      %c0_137 = arith.constant 0 : index
      %308 = vector.load %arg14[%c0_136, %c0_137] : memref<16x32xf32, #tpu.memory_space<vmem>>, vector<16x32xf32>
      tpu.vector_store %arg14[%c0_136, %c0_137], %307 {strides = array<i32>} : memref<16x32xf32, #tpu.memory_space<vmem>>, vector<16x32xf32>,
      %cst_138 = arith.constant 0.000000e+00 : f32
      %309 = vector.broadcast %cst_138 : f32 to vector<4x32xf32>
      %c0_139 = arith.constant 0 : index
      %c0_140 = arith.constant 0 : index
      %310 = vector.load %arg15[%c0_139, %c0_140] : memref<4x32xf32, #tpu.memory_space<vmem>>, vector<4x32xf32>
      tpu.vector_store %arg15[%c0_139, %c0_140], %309 {strides = array<i32>} : memref<4x32xf32, #tpu.memory_space<vmem>>, vector<4x32xf32>,
    } else {
    }
    %c0 = arith.constant 0 : index
    %c0_1 = arith.constant 0 : index
    %3 = vector.load %arg14[%c0, %c0_1] : memref<16x32xf32, #tpu.memory_space<vmem>>, vector<16x32xf32>
    %c0_2 = arith.constant 0 : index
    %c0_3 = arith.constant 0 : index
    %c0_4 = arith.constant 0 : index
    %4 = vector.load %arg4[%c0_2, %c0_3, %c0_4] : memref<1x32x384xf32, #tpu.memory_space<vmem>>, vector<1x32x96xf32>
    %5 = vector.shape_cast %4 : vector<1x32x96xf32> to vector<32x96xf32>
    %c0_5 = arith.constant 0 : index
    %c0_6 = arith.constant 0 : index
    %c0_7 = arith.constant 0 : index
    %6 = vector.load %arg6[%c0_5, %c0_6, %c0_7] : memref<1x1x608xf32, #tpu.memory_space<vmem>>, vector<1x1x96xf32>
    %7 = vector.shape_cast %6 : vector<1x1x96xf32> to vector<1x96xf32>
    %c0_8 = arith.constant 0 : index
    %c0_9 = arith.constant 0 : index
    %c96 = arith.constant 96 : index
    %8 = vector.load %arg4[%c0_8, %c0_9, %c96] : memref<1x32x384xf32, #tpu.memory_space<vmem>>, vector<1x32x32xf32>
    %9 = vector.shape_cast %8 : vector<1x32x32xf32> to vector<32x32xf32>
    %c0_10 = arith.constant 0 : index
    %c0_11 = arith.constant 0 : index
    %c96_12 = arith.constant 96 : index
    %10 = vector.load %arg6[%c0_10, %c0_11, %c96_12] : memref<1x1x608xf32, #tpu.memory_space<vmem>>, vector<1x1x32xf32>
    %11 = vector.shape_cast %10 : vector<1x1x32xf32> to vector<1x32xf32>
    %cst = arith.constant dense<0.000000e+00> : vector<16x96xf32>
    %12 = tpu.matmul %3, %5, %cst {dimension_numbers = #tpu.dot_dimension_numbers<[1], [0], [0], [1], [0, 0, 1, 1], [], []>} : vector<16x32xf32>, vector<32x96xf32>, vector<16x96xf32> -> vector<16x96xf32>
    %13 = vector.broadcast %7 : vector<1x96xf32> to vector<16x96xf32>
    %14 = arith.addf %12, %13 : vector<16x96xf32>
    %15 = vector.extract_strided_slice %14 {offsets = [0, 0], sizes = [16, 32], strides = [1, 1]} : vector<16x96xf32> to vector<16x32xf32>
    %16 = vector.extract_strided_slice %14 {offsets = [0, 32], sizes = [16, 32], strides = [1, 1]} : vector<16x96xf32> to vector<16x32xf32>
    %17 = vector.extract_strided_slice %14 {offsets = [0, 64], sizes = [16, 32], strides = [1, 1]} : vector<16x96xf32> to vector<16x32xf32>
    %18 = vector.extract_strided_slice %15 {offsets = [0, 0], sizes = [16, 8], strides = [1, 1]} : vector<16x32xf32> to vector<16x8xf32>
    %19 = vector.extract_strided_slice %16 {offsets = [0, 0], sizes = [16, 8], strides = [1, 1]} : vector<16x32xf32> to vector<16x8xf32>
    %cst_13 = arith.constant dense<0.000000e+00> : vector<16x16xf32>
    %20 = tpu.matmul %18, %19, %cst_13 {dimension_numbers = #tpu.dot_dimension_numbers<[1], [1], [0], [0], [0, 0, 1, 0], [], []>} : vector<16x8xf32>, vector<16x8xf32>, vector<16x16xf32> -> vector<16x16xf32>
    %cst_14 = arith.constant 0.353553385 : f32
    %21 = vector.broadcast %cst_14 : f32 to vector<16x16xf32>
    %22 = arith.mulf %20, %21 : vector<16x16xf32>
    %cst_15 = arith.constant dense<0xFF800000> : vector<16xf32>
    %23 = vector.multi_reduction <maximumf>, %22, %cst_15 [1] : vector<16x16xf32> to vector<16xf32>
    %24 = vector.shape_cast %23 : vector<16xf32> to vector<16x1xf32>
    %25 = vector.broadcast %24 : vector<16x1xf32> to vector<16x16xf32>
    %26 = arith.subf %22, %25 : vector<16x16xf32>
    %27 = math.exp %26 : vector<16x16xf32>
    %cst_16 = arith.constant dense<0.000000e+00> : vector<16xf32>
    %28 = vector.multi_reduction <add>, %27, %cst_16 [1] : vector<16x16xf32> to vector<16xf32>
    %29 = vector.shape_cast %28 : vector<16xf32> to vector<16x1xf32>
    %30 = vector.broadcast %29 : vector<16x1xf32> to vector<16x16xf32>
    %31 = arith.divf %27, %30 : vector<16x16xf32>
    %32 = vector.extract_strided_slice %17 {offsets = [0, 0], sizes = [16, 8], strides = [1, 1]} : vector<16x32xf32> to vector<16x8xf32>
    %cst_17 = arith.constant dense<0.000000e+00> : vector<16x8xf32>
    %33 = tpu.matmul %31, %32, %cst_17 {dimension_numbers = #tpu.dot_dimension_numbers<[1], [0], [0], [1], [0, 0, 1, 1], [], []>} : vector<16x16xf32>, vector<16x8xf32>, vector<16x8xf32> -> vector<16x8xf32>
    %34 = vector.extract_strided_slice %15 {offsets = [0, 8], sizes = [16, 8], strides = [1, 1]} : vector<16x32xf32> to vector<16x8xf32>
    %35 = vector.extract_strided_slice %16 {offsets = [0, 8], sizes = [16, 8], strides = [1, 1]} : vector<16x32xf32> to vector<16x8xf32>
    %cst_18 = arith.constant dense<0.000000e+00> : vector<16x16xf32>
    %36 = tpu.matmul %34, %35, %cst_18 {dimension_numbers = #tpu.dot_dimension_numbers<[1], [1], [0], [0], [0, 0, 1, 0], [], []>} : vector<16x8xf32>, vector<16x8xf32>, vector<16x16xf32> -> vector<16x16xf32>
    %cst_19 = arith.constant 0.353553385 : f32
    %37 = vector.broadcast %cst_19 : f32 to vector<16x16xf32>
    %38 = arith.mulf %36, %37 : vector<16x16xf32>
    %cst_20 = arith.constant dense<0xFF800000> : vector<16xf32>
    %39 = vector.multi_reduction <maximumf>, %38, %cst_20 [1] : vector<16x16xf32> to vector<16xf32>
    %40 = vector.shape_cast %39 : vector<16xf32> to vector<16x1xf32>
    %41 = vector.broadcast %40 : vector<16x1xf32> to vector<16x16xf32>
    %42 = arith.subf %38, %41 : vector<16x16xf32>
    %43 = math.exp %42 : vector<16x16xf32>
    %cst_21 = arith.constant dense<0.000000e+00> : vector<16xf32>
    %44 = vector.multi_reduction <add>, %43, %cst_21 [1] : vector<16x16xf32> to vector<16xf32>
    %45 = vector.shape_cast %44 : vector<16xf32> to vector<16x1xf32>
    %46 = vector.broadcast %45 : vector<16x1xf32> to vector<16x16xf32>
    %47 = arith.divf %43, %46 : vector<16x16xf32>
    %48 = vector.extract_strided_slice %17 {offsets = [0, 8], sizes = [16, 8], strides = [1, 1]} : vector<16x32xf32> to vector<16x8xf32>
    %cst_22 = arith.constant dense<0.000000e+00> : vector<16x8xf32>
    %49 = tpu.matmul %47, %48, %cst_22 {dimension_numbers = #tpu.dot_dimension_numbers<[1], [0], [0], [1], [0, 0, 1, 1], [], []>} : vector<16x16xf32>, vector<16x8xf32>, vector<16x8xf32> -> vector<16x8xf32>
    %50 = vector.extract_strided_slice %15 {offsets = [0, 16], sizes = [16, 8], strides = [1, 1]} : vector<16x32xf32> to vector<16x8xf32>
    %51 = vector.extract_strided_slice %16 {offsets = [0, 16], sizes = [16, 8], strides = [1, 1]} : vector<16x32xf32> to vector<16x8xf32>
    %cst_23 = arith.constant dense<0.000000e+00> : vector<16x16xf32>
    %52 = tpu.matmul %50, %51, %cst_23 {dimension_numbers = #tpu.dot_dimension_numbers<[1], [1], [0], [0], [0, 0, 1, 0], [], []>} : vector<16x8xf32>, vector<16x8xf32>, vector<16x16xf32> -> vector<16x16xf32>
    %cst_24 = arith.constant 0.353553385 : f32
    %53 = vector.broadcast %cst_24 : f32 to vector<16x16xf32>
    %54 = arith.mulf %52, %53 : vector<16x16xf32>
    %cst_25 = arith.constant dense<0xFF800000> : vector<16xf32>
    %55 = vector.multi_reduction <maximumf>, %54, %cst_25 [1] : vector<16x16xf32> to vector<16xf32>
    %56 = vector.shape_cast %55 : vector<16xf32> to vector<16x1xf32>
    %57 = vector.broadcast %56 : vector<16x1xf32> to vector<16x16xf32>
    %58 = arith.subf %54, %57 : vector<16x16xf32>
    %59 = math.exp %58 : vector<16x16xf32>
    %cst_26 = arith.constant dense<0.000000e+00> : vector<16xf32>
    %60 = vector.multi_reduction <add>, %59, %cst_26 [1] : vector<16x16xf32> to vector<16xf32>
    %61 = vector.shape_cast %60 : vector<16xf32> to vector<16x1xf32>
    %62 = vector.broadcast %61 : vector<16x1xf32> to vector<16x16xf32>
    %63 = arith.divf %59, %62 : vector<16x16xf32>
    %64 = vector.extract_strided_slice %17 {offsets = [0, 16], sizes = [16, 8], strides = [1, 1]} : vector<16x32xf32> to vector<16x8xf32>
    %cst_27 = arith.constant dense<0.000000e+00> : vector<16x8xf32>
    %65 = tpu.matmul %63, %64, %cst_27 {dimension_numbers = #tpu.dot_dimension_numbers<[1], [0], [0], [1], [0, 0, 1, 1], [], []>} : vector<16x16xf32>, vector<16x8xf32>, vector<16x8xf32> -> vector<16x8xf32>
    %66 = vector.extract_strided_slice %15 {offsets = [0, 24], sizes = [16, 8], strides = [1, 1]} : vector<16x32xf32> to vector<16x8xf32>
    %67 = vector.extract_strided_slice %16 {offsets = [0, 24], sizes = [16, 8], strides = [1, 1]} : vector<16x32xf32> to vector<16x8xf32>
    %cst_28 = arith.constant dense<0.000000e+00> : vector<16x16xf32>
    %68 = tpu.matmul %66, %67, %cst_28 {dimension_numbers = #tpu.dot_dimension_numbers<[1], [1], [0], [0], [0, 0, 1, 0], [], []>} : vector<16x8xf32>, vector<16x8xf32>, vector<16x16xf32> -> vector<16x16xf32>
    %cst_29 = arith.constant 0.353553385 : f32
    %69 = vector.broadcast %cst_29 : f32 to vector<16x16xf32>
    %70 = arith.mulf %68, %69 : vector<16x16xf32>
    %cst_30 = arith.constant dense<0xFF800000> : vector<16xf32>
    %71 = vector.multi_reduction <maximumf>, %70, %cst_30 [1] : vector<16x16xf32> to vector<16xf32>
    %72 = vector.shape_cast %71 : vector<16xf32> to vector<16x1xf32>
    %73 = vector.broadcast %72 : vector<16x1xf32> to vector<16x16xf32>
    %74 = arith.subf %70, %73 : vector<16x16xf32>
    %75 = math.exp %74 : vector<16x16xf32>
    %cst_31 = arith.constant dense<0.000000e+00> : vector<16xf32>
    %76 = vector.multi_reduction <add>, %75, %cst_31 [1] : vector<16x16xf32> to vector<16xf32>
    %77 = vector.shape_cast %76 : vector<16xf32> to vector<16x1xf32>
    %78 = vector.broadcast %77 : vector<16x1xf32> to vector<16x16xf32>
    %79 = arith.divf %75, %78 : vector<16x16xf32>
    %80 = vector.extract_strided_slice %17 {offsets = [0, 24], sizes = [16, 8], strides = [1, 1]} : vector<16x32xf32> to vector<16x8xf32>
    %cst_32 = arith.constant dense<0.000000e+00> : vector<16x8xf32>
    %81 = tpu.matmul %79, %80, %cst_32 {dimension_numbers = #tpu.dot_dimension_numbers<[1], [0], [0], [1], [0, 0, 1, 1], [], []>} : vector<16x16xf32>, vector<16x8xf32>, vector<16x8xf32> -> vector<16x8xf32>
    %82 = tpu.concatenate %33, %49, %65, %81 in 1 : vector<16x8xf32>, vector<16x8xf32>, vector<16x8xf32>, vector<16x8xf32> -> vector<16x32xf32>
    %cst_33 = arith.constant dense<0.000000e+00> : vector<16x32xf32>
    %83 = tpu.matmul %82, %9, %cst_33 {dimension_numbers = #tpu.dot_dimension_numbers<[1], [0], [0], [1], [0, 0, 1, 1], [], []>} : vector<16x32xf32>, vector<32x32xf32>, vector<16x32xf32> -> vector<16x32xf32>
    %84 = vector.broadcast %11 : vector<1x32xf32> to vector<16x32xf32>
    %85 = arith.addf %83, %84 : vector<16x32xf32>
    %86 = arith.addf %3, %85 : vector<16x32xf32>
    %c0_34 = arith.constant 0 : index
    %c0_35 = arith.constant 0 : index
    %c128 = arith.constant 128 : index
    %87 = vector.load %arg6[%c0_34, %c0_35, %c128] : memref<1x1x608xf32, #tpu.memory_space<vmem>>, vector<1x1x32xf32>
    %88 = vector.shape_cast %87 : vector<1x1x32xf32> to vector<1x32xf32>
    %c0_36 = arith.constant 0 : index
    %c0_37 = arith.constant 0 : index
    %c160 = arith.constant 160 : index
    %89 = vector.load %arg6[%c0_36, %c0_37, %c160] : memref<1x1x608xf32, #tpu.memory_space<vmem>>, vector<1x1x32xf32>
    %90 = vector.shape_cast %89 : vector<1x1x32xf32> to vector<1x32xf32>
    %cst_38 = arith.constant dense<0.000000e+00> : vector<16xf32>
    %91 = vector.multi_reduction <add>, %86, %cst_38 [1] : vector<16x32xf32> to vector<16xf32>
    %92 = vector.shape_cast %91 : vector<16xf32> to vector<16x1xf32>
    %cst_39 = arith.constant 3.200000e+01 : f32
    %93 = vector.broadcast %cst_39 : f32 to vector<16x1xf32>
    %94 = arith.divf %92, %93 : vector<16x1xf32>
    %95 = vector.broadcast %94 : vector<16x1xf32> to vector<16x32xf32>
    %96 = arith.subf %86, %95 : vector<16x32xf32>
    %97 = arith.mulf %96, %96 : vector<16x32xf32>
    %cst_40 = arith.constant dense<0.000000e+00> : vector<16xf32>
    %98 = vector.multi_reduction <add>, %97, %cst_40 [1] : vector<16x32xf32> to vector<16xf32>
    %99 = vector.shape_cast %98 : vector<16xf32> to vector<16x1xf32>
    %cst_41 = arith.constant 3.200000e+01 : f32
    %100 = vector.broadcast %cst_41 : f32 to vector<16x1xf32>
    %101 = arith.divf %99, %100 : vector<16x1xf32>
    %cst_42 = arith.constant 9.99999974E-6 : f32
    %102 = vector.broadcast %cst_42 : f32 to vector<16x1xf32>
    %103 = arith.addf %101, %102 : vector<16x1xf32>
    %104 = math.rsqrt %103 : vector<16x1xf32>
    %105 = vector.broadcast %104 : vector<16x1xf32> to vector<16x32xf32>
    %106 = arith.mulf %96, %105 : vector<16x32xf32>
    %107 = vector.broadcast %88 : vector<1x32xf32> to vector<16x32xf32>
    %108 = arith.mulf %106, %107 : vector<16x32xf32>
    %109 = vector.broadcast %90 : vector<1x32xf32> to vector<16x32xf32>
    %110 = arith.addf %108, %109 : vector<16x32xf32>
    %c0_43 = arith.constant 0 : index
    %c0_44 = arith.constant 0 : index
    %c128_45 = arith.constant 128 : index
    %111 = vector.load %arg4[%c0_43, %c0_44, %c128_45] : memref<1x32x384xf32, #tpu.memory_space<vmem>>, vector<1x32x128xf32>
    %112 = vector.shape_cast %111 : vector<1x32x128xf32> to vector<32x128xf32>
    %cst_46 = arith.constant dense<0.000000e+00> : vector<16x128xf32>
    %113 = tpu.matmul %110, %112, %cst_46 {dimension_numbers = #tpu.dot_dimension_numbers<[1], [0], [0], [1], [0, 0, 1, 1], [], []>} : vector<16x32xf32>, vector<32x128xf32>, vector<16x128xf32> -> vector<16x128xf32>
    %c0_47 = arith.constant 0 : index
    %c0_48 = arith.constant 0 : index
    %c192 = arith.constant 192 : index
    %114 = vector.load %arg6[%c0_47, %c0_48, %c192] : memref<1x1x608xf32, #tpu.memory_space<vmem>>, vector<1x1x128xf32>
    %115 = vector.shape_cast %114 : vector<1x1x128xf32> to vector<1x128xf32>
    %116 = vector.broadcast %115 : vector<1x128xf32> to vector<16x128xf32>
    %117 = arith.addf %113, %116 : vector<16x128xf32>
    %cst_49 = arith.constant 0.000000e+00 : f32
    %118 = vector.broadcast %cst_49 : f32 to vector<16x128xf32>
    %119 = arith.maximumf %117, %118 : vector<16x128xf32>
    %c0_50 = arith.constant 0 : index
    %c0_51 = arith.constant 0 : index
    %c0_52 = arith.constant 0 : index
    %120 = vector.load %arg5[%c0_50, %c0_51, %c0_52] : memref<1x128x32xf32, #tpu.memory_space<vmem>>, vector<1x128x32xf32>
    %121 = vector.shape_cast %120 : vector<1x128x32xf32> to vector<128x32xf32>
    %cst_53 = arith.constant dense<0.000000e+00> : vector<16x32xf32>
    %122 = tpu.matmul %119, %121, %cst_53 {dimension_numbers = #tpu.dot_dimension_numbers<[1], [0], [0], [1], [0, 0, 1, 1], [], []>} : vector<16x128xf32>, vector<128x32xf32>, vector<16x32xf32> -> vector<16x32xf32>
    %c0_54 = arith.constant 0 : index
    %c0_55 = arith.constant 0 : index
    %c320 = arith.constant 320 : index
    %123 = vector.load %arg6[%c0_54, %c0_55, %c320] : memref<1x1x608xf32, #tpu.memory_space<vmem>>, vector<1x1x32xf32>
    %124 = vector.shape_cast %123 : vector<1x1x32xf32> to vector<1x32xf32>
    %125 = vector.broadcast %124 : vector<1x32xf32> to vector<16x32xf32>
    %126 = arith.addf %122, %125 : vector<16x32xf32>
    %127 = arith.addf %110, %126 : vector<16x32xf32>
    %c0_56 = arith.constant 0 : index
    %c0_57 = arith.constant 0 : index
    %c352 = arith.constant 352 : index
    %128 = vector.load %arg6[%c0_56, %c0_57, %c352] : memref<1x1x608xf32, #tpu.memory_space<vmem>>, vector<1x1x32xf32>
    %129 = vector.shape_cast %128 : vector<1x1x32xf32> to vector<1x32xf32>
    %c0_58 = arith.constant 0 : index
    %c0_59 = arith.constant 0 : index
    %c384 = arith.constant 384 : index
    %130 = vector.load %arg6[%c0_58, %c0_59, %c384] : memref<1x1x608xf32, #tpu.memory_space<vmem>>, vector<1x1x32xf32>
    %131 = vector.shape_cast %130 : vector<1x1x32xf32> to vector<1x32xf32>
    %cst_60 = arith.constant dense<0.000000e+00> : vector<16xf32>
    %132 = vector.multi_reduction <add>, %127, %cst_60 [1] : vector<16x32xf32> to vector<16xf32>
    %133 = vector.shape_cast %132 : vector<16xf32> to vector<16x1xf32>
    %cst_61 = arith.constant 3.200000e+01 : f32
    %134 = vector.broadcast %cst_61 : f32 to vector<16x1xf32>
    %135 = arith.divf %133, %134 : vector<16x1xf32>
    %136 = vector.broadcast %135 : vector<16x1xf32> to vector<16x32xf32>
    %137 = arith.subf %127, %136 : vector<16x32xf32>
    %138 = arith.mulf %137, %137 : vector<16x32xf32>
    %cst_62 = arith.constant dense<0.000000e+00> : vector<16xf32>
    %139 = vector.multi_reduction <add>, %138, %cst_62 [1] : vector<16x32xf32> to vector<16xf32>
    %140 = vector.shape_cast %139 : vector<16xf32> to vector<16x1xf32>
    %cst_63 = arith.constant 3.200000e+01 : f32
    %141 = vector.broadcast %cst_63 : f32 to vector<16x1xf32>
    %142 = arith.divf %140, %141 : vector<16x1xf32>
    %cst_64 = arith.constant 9.99999974E-6 : f32
    %143 = vector.broadcast %cst_64 : f32 to vector<16x1xf32>
    %144 = arith.addf %142, %143 : vector<16x1xf32>
    %145 = math.rsqrt %144 : vector<16x1xf32>
    %146 = vector.broadcast %145 : vector<16x1xf32> to vector<16x32xf32>
    %147 = arith.mulf %137, %146 : vector<16x32xf32>
    %148 = vector.broadcast %129 : vector<1x32xf32> to vector<16x32xf32>
    %149 = arith.mulf %147, %148 : vector<16x32xf32>
    %150 = vector.broadcast %131 : vector<1x32xf32> to vector<16x32xf32>
    %151 = arith.addf %149, %150 : vector<16x32xf32>
    %c0_65 = arith.constant 0 : index
    %c0_66 = arith.constant 0 : index
    %152 = vector.load %arg14[%c0_65, %c0_66] : memref<16x32xf32, #tpu.memory_space<vmem>>, vector<16x32xf32>
    tpu.vector_store %arg14[%c0_65, %c0_66], %151 {strides = array<i32>} : memref<16x32xf32, #tpu.memory_space<vmem>>, vector<16x32xf32>,
    %c0_67 = arith.constant 0 : index
    %c0_68 = arith.constant 0 : index
    %c0_69 = arith.constant 0 : index
    %153 = vector.load %arg7[%c0_67, %c0_68, %c0_69] : memref<1x8x32xf32, #tpu.memory_space<vmem>>, vector<1x8x32xf32>
    %154 = vector.shape_cast %153 : vector<1x8x32xf32> to vector<8x32xf32>
    %c0_70 = arith.constant 0 : index
    %c0_71 = arith.constant 0 : index
    %c256 = arith.constant 256 : index
    %155 = vector.load %arg4[%c0_70, %c0_71, %c256] : memref<1x32x384xf32, #tpu.memory_space<vmem>>, vector<1x32x96xf32>
    %156 = vector.shape_cast %155 : vector<1x32x96xf32> to vector<32x96xf32>
    %c0_72 = arith.constant 0 : index
    %c0_73 = arith.constant 0 : index
    %c416 = arith.constant 416 : index
    %157 = vector.load %arg6[%c0_72, %c0_73, %c416] : memref<1x1x608xf32, #tpu.memory_space<vmem>>, vector<1x1x96xf32>
    %158 = vector.shape_cast %157 : vector<1x1x96xf32> to vector<1x96xf32>
    %c0_74 = arith.constant 0 : index
    %c0_75 = arith.constant 0 : index
    %c352_76 = arith.constant 352 : index
    %159 = vector.load %arg4[%c0_74, %c0_75, %c352_76] : memref<1x32x384xf32, #tpu.memory_space<vmem>>, vector<1x32x32xf32>
    %160 = vector.shape_cast %159 : vector<1x32x32xf32> to vector<32x32xf32>
    %c0_77 = arith.constant 0 : index
    %c0_78 = arith.constant 0 : index
    %c512 = arith.constant 512 : index
    %161 = vector.load %arg6[%c0_77, %c0_78, %c512] : memref<1x1x608xf32, #tpu.memory_space<vmem>>, vector<1x1x32xf32>
    %162 = vector.shape_cast %161 : vector<1x1x32xf32> to vector<1x32xf32>
    %163 = vector.extract_strided_slice %156 {offsets = [0, 0], sizes = [32, 32], strides = [1, 1]} : vector<32x96xf32> to vector<32x32xf32>
    %cst_79 = arith.constant dense<0.000000e+00> : vector<8x32xf32>
    %164 = tpu.matmul %154, %163, %cst_79 {dimension_numbers = #tpu.dot_dimension_numbers<[1], [0], [0], [1], [0, 0, 1, 1], [], []>} : vector<8x32xf32>, vector<32x32xf32>, vector<8x32xf32> -> vector<8x32xf32>
    %165 = vector.extract_strided_slice %158 {offsets = [0, 0], sizes = [1, 32], strides = [1, 1]} : vector<1x96xf32> to vector<1x32xf32>
    %166 = vector.broadcast %165 : vector<1x32xf32> to vector<8x32xf32>
    %167 = arith.addf %164, %166 : vector<8x32xf32>
    %168 = vector.extract_strided_slice %156 {offsets = [0, 32], sizes = [32, 64], strides = [1, 1]} : vector<32x96xf32> to vector<32x64xf32>
    %cst_80 = arith.constant dense<0.000000e+00> : vector<16x64xf32>
    %169 = tpu.matmul %151, %168, %cst_80 {dimension_numbers = #tpu.dot_dimension_numbers<[1], [0], [0], [1], [0, 0, 1, 1], [], []>} : vector<16x32xf32>, vector<32x64xf32>, vector<16x64xf32> -> vector<16x64xf32>
    %170 = vector.extract_strided_slice %158 {offsets = [0, 32], sizes = [1, 64], strides = [1, 1]} : vector<1x96xf32> to vector<1x64xf32>
    %171 = vector.broadcast %170 : vector<1x64xf32> to vector<16x64xf32>
    %172 = arith.addf %169, %171 : vector<16x64xf32>
    %173 = vector.extract_strided_slice %172 {offsets = [0, 0], sizes = [16, 32], strides = [1, 1]} : vector<16x64xf32> to vector<16x32xf32>
    %174 = vector.extract_strided_slice %172 {offsets = [0, 32], sizes = [16, 32], strides = [1, 1]} : vector<16x64xf32> to vector<16x32xf32>
    %175 = vector.extract_strided_slice %167 {offsets = [0, 0], sizes = [8, 8], strides = [1, 1]} : vector<8x32xf32> to vector<8x8xf32>
    %176 = vector.extract_strided_slice %173 {offsets = [0, 0], sizes = [16, 8], strides = [1, 1]} : vector<16x32xf32> to vector<16x8xf32>
    %cst_81 = arith.constant dense<0.000000e+00> : vector<8x16xf32>
    %177 = tpu.matmul %175, %176, %cst_81 {dimension_numbers = #tpu.dot_dimension_numbers<[1], [1], [0], [0], [0, 0, 1, 0], [], []>} : vector<8x8xf32>, vector<16x8xf32>, vector<8x16xf32> -> vector<8x16xf32>
    %cst_82 = arith.constant 0.353553385 : f32
    %178 = vector.broadcast %cst_82 : f32 to vector<8x16xf32>
    %179 = arith.mulf %177, %178 : vector<8x16xf32>
    %cst_83 = arith.constant dense<0xFF800000> : vector<8xf32>
    %180 = vector.multi_reduction <maximumf>, %179, %cst_83 [1] : vector<8x16xf32> to vector<8xf32>
    %181 = vector.shape_cast %180 : vector<8xf32> to vector<8x1xf32>
    %182 = vector.broadcast %181 : vector<8x1xf32> to vector<8x16xf32>
    %183 = arith.subf %179, %182 : vector<8x16xf32>
    %184 = math.exp %183 : vector<8x16xf32>
    %cst_84 = arith.constant dense<0.000000e+00> : vector<8xf32>
    %185 = vector.multi_reduction <add>, %184, %cst_84 [1] : vector<8x16xf32> to vector<8xf32>
    %186 = vector.shape_cast %185 : vector<8xf32> to vector<8x1xf32>
    %187 = vector.broadcast %186 : vector<8x1xf32> to vector<8x16xf32>
    %188 = arith.divf %184, %187 : vector<8x16xf32>
    %189 = vector.extract_strided_slice %174 {offsets = [0, 0], sizes = [16, 8], strides = [1, 1]} : vector<16x32xf32> to vector<16x8xf32>
    %cst_85 = arith.constant dense<0.000000e+00> : vector<8x8xf32>
    %190 = tpu.matmul %188, %189, %cst_85 {dimension_numbers = #tpu.dot_dimension_numbers<[1], [0], [0], [1], [0, 0, 1, 1], [], []>} : vector<8x16xf32>, vector<16x8xf32>, vector<8x8xf32> -> vector<8x8xf32>
    %191 = vector.extract_strided_slice %167 {offsets = [0, 8], sizes = [8, 8], strides = [1, 1]} : vector<8x32xf32> to vector<8x8xf32>
    %192 = vector.extract_strided_slice %173 {offsets = [0, 8], sizes = [16, 8], strides = [1, 1]} : vector<16x32xf32> to vector<16x8xf32>
    %cst_86 = arith.constant dense<0.000000e+00> : vector<8x16xf32>
    %193 = tpu.matmul %191, %192, %cst_86 {dimension_numbers = #tpu.dot_dimension_numbers<[1], [1], [0], [0], [0, 0, 1, 0], [], []>} : vector<8x8xf32>, vector<16x8xf32>, vector<8x16xf32> -> vector<8x16xf32>
    %cst_87 = arith.constant 0.353553385 : f32
    %194 = vector.broadcast %cst_87 : f32 to vector<8x16xf32>
    %195 = arith.mulf %193, %194 : vector<8x16xf32>
    %cst_88 = arith.constant dense<0xFF800000> : vector<8xf32>
    %196 = vector.multi_reduction <maximumf>, %195, %cst_88 [1] : vector<8x16xf32> to vector<8xf32>
    %197 = vector.shape_cast %196 : vector<8xf32> to vector<8x1xf32>
    %198 = vector.broadcast %197 : vector<8x1xf32> to vector<8x16xf32>
    %199 = arith.subf %195, %198 : vector<8x16xf32>
    %200 = math.exp %199 : vector<8x16xf32>
    %cst_89 = arith.constant dense<0.000000e+00> : vector<8xf32>
    %201 = vector.multi_reduction <add>, %200, %cst_89 [1] : vector<8x16xf32> to vector<8xf32>
    %202 = vector.shape_cast %201 : vector<8xf32> to vector<8x1xf32>
    %203 = vector.broadcast %202 : vector<8x1xf32> to vector<8x16xf32>
    %204 = arith.divf %200, %203 : vector<8x16xf32>
    %205 = vector.extract_strided_slice %174 {offsets = [0, 8], sizes = [16, 8], strides = [1, 1]} : vector<16x32xf32> to vector<16x8xf32>
    %cst_90 = arith.constant dense<0.000000e+00> : vector<8x8xf32>
    %206 = tpu.matmul %204, %205, %cst_90 {dimension_numbers = #tpu.dot_dimension_numbers<[1], [0], [0], [1], [0, 0, 1, 1], [], []>} : vector<8x16xf32>, vector<16x8xf32>, vector<8x8xf32> -> vector<8x8xf32>
    %207 = arith.addf %188, %204 : vector<8x16xf32>
    %208 = vector.extract_strided_slice %167 {offsets = [0, 16], sizes = [8, 8], strides = [1, 1]} : vector<8x32xf32> to vector<8x8xf32>
    %209 = vector.extract_strided_slice %173 {offsets = [0, 16], sizes = [16, 8], strides = [1, 1]} : vector<16x32xf32> to vector<16x8xf32>
    %cst_91 = arith.constant dense<0.000000e+00> : vector<8x16xf32>
    %210 = tpu.matmul %208, %209, %cst_91 {dimension_numbers = #tpu.dot_dimension_numbers<[1], [1], [0], [0], [0, 0, 1, 0], [], []>} : vector<8x8xf32>, vector<16x8xf32>, vector<8x16xf32> -> vector<8x16xf32>
    %cst_92 = arith.constant 0.353553385 : f32
    %211 = vector.broadcast %cst_92 : f32 to vector<8x16xf32>
    %212 = arith.mulf %210, %211 : vector<8x16xf32>
    %cst_93 = arith.constant dense<0xFF800000> : vector<8xf32>
    %213 = vector.multi_reduction <maximumf>, %212, %cst_93 [1] : vector<8x16xf32> to vector<8xf32>
    %214 = vector.shape_cast %213 : vector<8xf32> to vector<8x1xf32>
    %215 = vector.broadcast %214 : vector<8x1xf32> to vector<8x16xf32>
    %216 = arith.subf %212, %215 : vector<8x16xf32>
    %217 = math.exp %216 : vector<8x16xf32>
    %cst_94 = arith.constant dense<0.000000e+00> : vector<8xf32>
    %218 = vector.multi_reduction <add>, %217, %cst_94 [1] : vector<8x16xf32> to vector<8xf32>
    %219 = vector.shape_cast %218 : vector<8xf32> to vector<8x1xf32>
    %220 = vector.broadcast %219 : vector<8x1xf32> to vector<8x16xf32>
    %221 = arith.divf %217, %220 : vector<8x16xf32>
    %222 = vector.extract_strided_slice %174 {offsets = [0, 16], sizes = [16, 8], strides = [1, 1]} : vector<16x32xf32> to vector<16x8xf32>
    %cst_95 = arith.constant dense<0.000000e+00> : vector<8x8xf32>
    %223 = tpu.matmul %221, %222, %cst_95 {dimension_numbers = #tpu.dot_dimension_numbers<[1], [0], [0], [1], [0, 0, 1, 1], [], []>} : vector<8x16xf32>, vector<16x8xf32>, vector<8x8xf32> -> vector<8x8xf32>
    %224 = arith.addf %207, %221 : vector<8x16xf32>
    %225 = vector.extract_strided_slice %167 {offsets = [0, 24], sizes = [8, 8], strides = [1, 1]} : vector<8x32xf32> to vector<8x8xf32>
    %226 = vector.extract_strided_slice %173 {offsets = [0, 24], sizes = [16, 8], strides = [1, 1]} : vector<16x32xf32> to vector<16x8xf32>
    %cst_96 = arith.constant dense<0.000000e+00> : vector<8x16xf32>
    %227 = tpu.matmul %225, %226, %cst_96 {dimension_numbers = #tpu.dot_dimension_numbers<[1], [1], [0], [0], [0, 0, 1, 0], [], []>} : vector<8x8xf32>, vector<16x8xf32>, vector<8x16xf32> -> vector<8x16xf32>
    %cst_97 = arith.constant 0.353553385 : f32
    %228 = vector.broadcast %cst_97 : f32 to vector<8x16xf32>
    %229 = arith.mulf %227, %228 : vector<8x16xf32>
    %cst_98 = arith.constant dense<0xFF800000> : vector<8xf32>
    %230 = vector.multi_reduction <maximumf>, %229, %cst_98 [1] : vector<8x16xf32> to vector<8xf32>
    %231 = vector.shape_cast %230 : vector<8xf32> to vector<8x1xf32>
    %232 = vector.broadcast %231 : vector<8x1xf32> to vector<8x16xf32>
    %233 = arith.subf %229, %232 : vector<8x16xf32>
    %234 = math.exp %233 : vector<8x16xf32>
    %cst_99 = arith.constant dense<0.000000e+00> : vector<8xf32>
    %235 = vector.multi_reduction <add>, %234, %cst_99 [1] : vector<8x16xf32> to vector<8xf32>
    %236 = vector.shape_cast %235 : vector<8xf32> to vector<8x1xf32>
    %237 = vector.broadcast %236 : vector<8x1xf32> to vector<8x16xf32>
    %238 = arith.divf %234, %237 : vector<8x16xf32>
    %239 = vector.extract_strided_slice %174 {offsets = [0, 24], sizes = [16, 8], strides = [1, 1]} : vector<16x32xf32> to vector<16x8xf32>
    %cst_100 = arith.constant dense<0.000000e+00> : vector<8x8xf32>
    %240 = tpu.matmul %238, %239, %cst_100 {dimension_numbers = #tpu.dot_dimension_numbers<[1], [0], [0], [1], [0, 0, 1, 1], [], []>} : vector<8x16xf32>, vector<16x8xf32>, vector<8x8xf32> -> vector<8x8xf32>
    %241 = arith.addf %224, %238 : vector<8x16xf32>
    %242 = tpu.concatenate %190, %206, %223, %240 in 1 : vector<8x8xf32>, vector<8x8xf32>, vector<8x8xf32>, vector<8x8xf32> -> vector<8x32xf32>
    %cst_101 = arith.constant dense<0.000000e+00> : vector<8x32xf32>
    %243 = tpu.matmul %242, %160, %cst_101 {dimension_numbers = #tpu.dot_dimension_numbers<[1], [0], [0], [1], [0, 0, 1, 1], [], []>} : vector<8x32xf32>, vector<32x32xf32>, vector<8x32xf32> -> vector<8x32xf32>
    %244 = vector.broadcast %162 : vector<1x32xf32> to vector<8x32xf32>
    %245 = arith.addf %243, %244 : vector<8x32xf32>
    %cst_102 = arith.constant 2.500000e-01 : f32
    %246 = vector.broadcast %cst_102 : f32 to vector<8x16xf32>
    %247 = arith.mulf %241, %246 : vector<8x16xf32>
    %c0_103 = arith.constant 0 : index
    %c0_104 = arith.constant 0 : index
    %c544 = arith.constant 544 : index
    %248 = vector.load %arg6[%c0_103, %c0_104, %c544] : memref<1x1x608xf32, #tpu.memory_space<vmem>>, vector<1x1x32xf32>
    %249 = vector.shape_cast %248 : vector<1x1x32xf32> to vector<1x32xf32>
    %c0_105 = arith.constant 0 : index
    %c0_106 = arith.constant 0 : index
    %c576 = arith.constant 576 : index
    %250 = vector.load %arg6[%c0_105, %c0_106, %c576] : memref<1x1x608xf32, #tpu.memory_space<vmem>>, vector<1x1x32xf32>
    %251 = vector.shape_cast %250 : vector<1x1x32xf32> to vector<1x32xf32>
    %cst_107 = arith.constant dense<0.000000e+00> : vector<8xf32>
    %252 = vector.multi_reduction <add>, %245, %cst_107 [1] : vector<8x32xf32> to vector<8xf32>
    %253 = vector.shape_cast %252 : vector<8xf32> to vector<8x1xf32>
    %cst_108 = arith.constant 3.200000e+01 : f32
    %254 = vector.broadcast %cst_108 : f32 to vector<8x1xf32>
    %255 = arith.divf %253, %254 : vector<8x1xf32>
    %256 = vector.broadcast %255 : vector<8x1xf32> to vector<8x32xf32>
    %257 = arith.subf %245, %256 : vector<8x32xf32>
    %258 = arith.mulf %257, %257 : vector<8x32xf32>
    %cst_109 = arith.constant dense<0.000000e+00> : vector<8xf32>
    %259 = vector.multi_reduction <add>, %258, %cst_109 [1] : vector<8x32xf32> to vector<8xf32>
    %260 = vector.shape_cast %259 : vector<8xf32> to vector<8x1xf32>
    %cst_110 = arith.constant 3.200000e+01 : f32
    %261 = vector.broadcast %cst_110 : f32 to vector<8x1xf32>
    %262 = arith.divf %260, %261 : vector<8x1xf32>
    %cst_111 = arith.constant 9.99999974E-6 : f32
    %263 = vector.broadcast %cst_111 : f32 to vector<8x1xf32>
    %264 = arith.addf %262, %263 : vector<8x1xf32>
    %265 = math.rsqrt %264 : vector<8x1xf32>
    %266 = vector.broadcast %265 : vector<8x1xf32> to vector<8x32xf32>
    %267 = arith.mulf %257, %266 : vector<8x32xf32>
    %268 = vector.broadcast %249 : vector<1x32xf32> to vector<8x32xf32>
    %269 = arith.mulf %267, %268 : vector<8x32xf32>
    %270 = vector.broadcast %251 : vector<1x32xf32> to vector<8x32xf32>
    %271 = arith.addf %269, %270 : vector<8x32xf32>
    %c0_112 = arith.constant 0 : index
    %c0_113 = arith.constant 0 : index
    %c0_114 = arith.constant 0 : index
    %c0_115 = arith.constant 0 : index
    %272 = vector.load %arg13[%c0_112, %c0_113, %c0_114, %c0_115] : memref<1x1x8x16xf32, #tpu.memory_space<vmem>>, vector<1x1x8x16xf32>
    %273 = vector.shape_cast %272 : vector<1x1x8x16xf32> to vector<8x16xf32>
    %274 = vector.shape_cast %247 : vector<8x16xf32> to vector<1x1x8x16xf32>
    tpu.vector_store %arg13[%c0_112, %c0_113, %c0_114, %c0_115], %274 {strides = array<i32>} : memref<1x1x8x16xf32, #tpu.memory_space<vmem>>, vector<1x1x8x16xf32>,
    %c0_116 = arith.constant 0 : index
    %c0_117 = arith.constant 0 : index
    %275 = vector.load %arg15[%c0_116, %c0_117] : memref<4x32xf32, #tpu.memory_space<vmem>>, vector<4x32xf32>
    %c0_118 = arith.constant 0 : index
    %c0_119 = arith.constant 0 : index
    %c0_120 = arith.constant 0 : index
    %276 = vector.load %arg8[%c0_118, %c0_119, %c0_120] : memref<1x4x8xf32, #tpu.memory_space<vmem>>, vector<1x4x8xf32>
    %277 = vector.shape_cast %276 : vector<1x4x8xf32> to vector<4x8xf32>
    %cst_121 = arith.constant dense<0.000000e+00> : vector<4x32xf32>
    %278 = tpu.matmul %277, %271, %cst_121 {dimension_numbers = #tpu.dot_dimension_numbers<[1], [0], [0], [1], [0, 0, 1, 1], [], []>} : vector<4x8xf32>, vector<8x32xf32>, vector<4x32xf32> -> vector<4x32xf32>
    %279 = arith.addf %275, %278 : vector<4x32xf32>
    %c0_122 = arith.constant 0 : index
    %c0_123 = arith.constant 0 : index
    %280 = vector.load %arg15[%c0_122, %c0_123] : memref<4x32xf32, #tpu.memory_space<vmem>>, vector<4x32xf32>
    tpu.vector_store %arg15[%c0_122, %c0_123], %279 {strides = array<i32>} : memref<4x32xf32, #tpu.memory_space<vmem>>, vector<4x32xf32>,
    %c1_i32 = arith.constant 1 : i32
    %281 = arith.cmpi eq, %arg1, %c1_i32 : i32
    %282 = arith.extui %281 : i1 to i32
    %c0_i32_124 = arith.constant 0 : i32
    %283 = arith.cmpi ne, %282, %c0_i32_124 : i32
    scf.if %283 {
      %c0_125 = arith.constant 0 : index
      %c0_126 = arith.constant 0 : index
      %284 = vector.load %arg15[%c0_125, %c0_126] : memref<4x32xf32, #tpu.memory_space<vmem>>, vector<4x32xf32>
      %c0_127 = arith.constant 0 : index
      %c0_128 = arith.constant 0 : index
      %285 = vector.load %arg9[%c0_127, %c0_128] : memref<4x1xf32, #tpu.memory_space<vmem>>, vector<4x1xf32>
      %286 = vector.broadcast %285 : vector<4x1xf32> to vector<4x32xf32>
      %287 = arith.addf %284, %286 : vector<4x32xf32>
      %c0_129 = arith.constant 0 : index
      %c0_130 = arith.constant 0 : index
      %288 = vector.load %arg11[%c0_129, %c0_130] : memref<1x32xf32, #tpu.memory_space<vmem>>, vector<1x32xf32>
      %289 = vector.extract_strided_slice %287 {offsets = [0, 0], sizes = [1, 32], strides = [1, 1]} : vector<4x32xf32> to vector<1x32xf32>
      %c0_131 = arith.constant 0 : index
      %c0_132 = arith.constant 0 : index
      %c0_133 = arith.constant 0 : index
      %290 = vector.load %arg10[%c0_131, %c0_132, %c0_133] : memref<4x32x32xf32, #tpu.memory_space<vmem>>, vector<1x32x32xf32>
      %291 = vector.shape_cast %290 : vector<1x32x32xf32> to vector<32x32xf32>
      %cst_134 = arith.constant dense<0.000000e+00> : vector<1x32xf32>
      %292 = tpu.matmul %289, %291, %cst_134 {dimension_numbers = #tpu.dot_dimension_numbers<[1], [0], [0], [1], [0, 0, 1, 1], [], []>} : vector<1x32xf32>, vector<32x32xf32>, vector<1x32xf32> -> vector<1x32xf32>
      %293 = arith.addf %288, %292 : vector<1x32xf32>
      %294 = vector.extract_strided_slice %287 {offsets = [1, 0], sizes = [1, 32], strides = [1, 1]} : vector<4x32xf32> to vector<1x32xf32>
      %c1 = arith.constant 1 : index
      %c0_135 = arith.constant 0 : index
      %c0_136 = arith.constant 0 : index
      %295 = vector.load %arg10[%c1, %c0_135, %c0_136] : memref<4x32x32xf32, #tpu.memory_space<vmem>>, vector<1x32x32xf32>
      %296 = vector.shape_cast %295 : vector<1x32x32xf32> to vector<32x32xf32>
      %cst_137 = arith.constant dense<0.000000e+00> : vector<1x32xf32>
      %297 = tpu.matmul %294, %296, %cst_137 {dimension_numbers = #tpu.dot_dimension_numbers<[1], [0], [0], [1], [0, 0, 1, 1], [], []>} : vector<1x32xf32>, vector<32x32xf32>, vector<1x32xf32> -> vector<1x32xf32>
      %298 = arith.addf %293, %297 : vector<1x32xf32>
      %299 = vector.extract_strided_slice %287 {offsets = [2, 0], sizes = [1, 32], strides = [1, 1]} : vector<4x32xf32> to vector<1x32xf32>
      %c2 = arith.constant 2 : index
      %c0_138 = arith.constant 0 : index
      %c0_139 = arith.constant 0 : index
      %300 = vector.load %arg10[%c2, %c0_138, %c0_139] : memref<4x32x32xf32, #tpu.memory_space<vmem>>, vector<1x32x32xf32>
      %301 = vector.shape_cast %300 : vector<1x32x32xf32> to vector<32x32xf32>
      %cst_140 = arith.constant dense<0.000000e+00> : vector<1x32xf32>
      %302 = tpu.matmul %299, %301, %cst_140 {dimension_numbers = #tpu.dot_dimension_numbers<[1], [0], [0], [1], [0, 0, 1, 1], [], []>} : vector<1x32xf32>, vector<32x32xf32>, vector<1x32xf32> -> vector<1x32xf32>
      %303 = arith.addf %298, %302 : vector<1x32xf32>
      %304 = vector.extract_strided_slice %287 {offsets = [3, 0], sizes = [1, 32], strides = [1, 1]} : vector<4x32xf32> to vector<1x32xf32>
      %c3 = arith.constant 3 : index
      %c0_141 = arith.constant 0 : index
      %c0_142 = arith.constant 0 : index
      %305 = vector.load %arg10[%c3, %c0_141, %c0_142] : memref<4x32x32xf32, #tpu.memory_space<vmem>>, vector<1x32x32xf32>
      %306 = vector.shape_cast %305 : vector<1x32x32xf32> to vector<32x32xf32>
      %cst_143 = arith.constant dense<0.000000e+00> : vector<1x32xf32>
      %307 = tpu.matmul %304, %306, %cst_143 {dimension_numbers = #tpu.dot_dimension_numbers<[1], [0], [0], [1], [0, 0, 1, 1], [], []>} : vector<1x32xf32>, vector<32x32xf32>, vector<1x32xf32> -> vector<1x32xf32>
      %308 = arith.addf %303, %307 : vector<1x32xf32>
      %309 = arith.mulf %308, %308 : vector<1x32xf32>
      %cst_144 = arith.constant dense<0.000000e+00> : vector<1xf32>
      %310 = vector.multi_reduction <add>, %309, %cst_144 [1] : vector<1x32xf32> to vector<1xf32>
      %311 = vector.shape_cast %310 : vector<1xf32> to vector<1x1xf32>
      %cst_145 = arith.constant 1.000000e-24 : f32
      %312 = vector.broadcast %cst_145 : f32 to vector<1x1xf32>
      %313 = arith.maximumf %311, %312 : vector<1x1xf32>
      %314 = math.rsqrt %313 : vector<1x1xf32>
      %315 = vector.broadcast %314 : vector<1x1xf32> to vector<1x32xf32>
      %316 = arith.mulf %308, %315 : vector<1x32xf32>
      %c0_146 = arith.constant 0 : index
      %c0_147 = arith.constant 0 : index
      %c0_148 = arith.constant 0 : index
      %317 = vector.load %arg12[%c0_146, %c0_147, %c0_148] : memref<1x1x32xf32, #tpu.memory_space<vmem>>, vector<1x1x32xf32>
      %318 = vector.shape_cast %317 : vector<1x1x32xf32> to vector<1x32xf32>
      %319 = vector.shape_cast %316 : vector<1x32xf32> to vector<1x1x32xf32>
      tpu.vector_store %arg12[%c0_146, %c0_147, %c0_148], %319 {strides = array<i32>} : memref<1x1x32xf32, #tpu.memory_space<vmem>>, vector<1x1x32xf32>,
    } else {
    }
    return
  }
  func.func @transform_0(%arg0: i32, %arg1: i32) -> (i32, i32, i32) {
    %c0_i32 = arith.constant 0 : i32
    %c0_i32_0 = arith.constant 0 : i32
    %c0_i32_1 = arith.constant 0 : i32
    return %arg0, %c0_i32, %c0_i32_0 : i32, i32, i32
  }
  func.func @transform_1(%arg0: i32, %arg1: i32) -> (i32, i32) {
    %c0_i32 = arith.constant 0 : i32
    %c0_i32_0 = arith.constant 0 : i32
    %c0_i32_1 = arith.constant 0 : i32
    return %c0_i32, %c0_i32_0 : i32, i32
  }
  func.func @transform_2(%arg0: i32, %arg1: i32) -> (i32, i32, i32) {
    %c0_i32 = arith.constant 0 : i32
    %c0_i32_0 = arith.constant 0 : i32
    %c0_i32_1 = arith.constant 0 : i32
    return %arg1, %c0_i32, %c0_i32_0 : i32, i32, i32
  }
  func.func @transform_3(%arg0: i32, %arg1: i32) -> (i32, i32, i32) {
    %c0_i32 = arith.constant 0 : i32
    %c0_i32_0 = arith.constant 0 : i32
    %c0_i32_1 = arith.constant 0 : i32
    return %arg1, %c0_i32, %c0_i32_0 : i32, i32, i32
  }
  func.func @transform_4(%arg0: i32, %arg1: i32) -> (i32, i32, i32) {
    %c0_i32 = arith.constant 0 : i32
    %c0_i32_0 = arith.constant 0 : i32
    %c0_i32_1 = arith.constant 0 : i32
    return %arg1, %c0_i32, %c0_i32_0 : i32, i32, i32
  }
  func.func @transform_5(%arg0: i32, %arg1: i32) -> (i32, i32, i32) {
    %c0_i32 = arith.constant 0 : i32
    %c0_i32_0 = arith.constant 0 : i32
    %c0_i32_1 = arith.constant 0 : i32
    return %arg1, %c0_i32, %c0_i32_0 : i32, i32, i32
  }
  func.func @transform_6(%arg0: i32, %arg1: i32) -> (i32, i32, i32) {
    %c0_i32 = arith.constant 0 : i32
    %c0_i32_0 = arith.constant 0 : i32
    %c0_i32_1 = arith.constant 0 : i32
    return %arg1, %c0_i32, %c0_i32_0 : i32, i32, i32
  }
  func.func @transform_7(%arg0: i32, %arg1: i32) -> (i32, i32) {
    %c0_i32 = arith.constant 0 : i32
    %c0_i32_0 = arith.constant 0 : i32
    %c0_i32_1 = arith.constant 0 : i32
    return %c0_i32, %c0_i32_0 : i32, i32
  }
  func.func @transform_8(%arg0: i32, %arg1: i32) -> (i32, i32, i32) {
    %c0_i32 = arith.constant 0 : i32
    %c0_i32_0 = arith.constant 0 : i32
    %c0_i32_1 = arith.constant 0 : i32
    %c0_i32_2 = arith.constant 0 : i32
    return %c0_i32, %c0_i32_0, %c0_i32_1 : i32, i32, i32
  }
  func.func @transform_9(%arg0: i32, %arg1: i32) -> (i32, i32) {
    %c0_i32 = arith.constant 0 : i32
    %c0_i32_0 = arith.constant 0 : i32
    %c0_i32_1 = arith.constant 0 : i32
    return %c0_i32, %c0_i32_0 : i32, i32
  }
  func.func @transform_10(%arg0: i32, %arg1: i32) -> (i32, i32, i32) {
    %c0_i32 = arith.constant 0 : i32
    %c0_i32_0 = arith.constant 0 : i32
    %c0_i32_1 = arith.constant 0 : i32
    return %arg0, %c0_i32, %c0_i32_0 : i32, i32, i32
  }
  func.func @transform_11(%arg0: i32, %arg1: i32) -> (i32, i32, i32, i32) {
    %c0_i32 = arith.constant 0 : i32
    %c0_i32_0 = arith.constant 0 : i32
    %c0_i32_1 = arith.constant 0 : i32
    return %arg0, %arg1, %c0_i32, %c0_i32_0 : i32, i32, i32, i32
  }
}

</mosaic_0001>

<llo_original>
// kernel: boq_forward.1
$region0: #{boq_forward.1}
  #allocation0 [shape = 'u32[]', space=smem, size = 0x4, offset = 0x4, fixed_abs, tag = 'smem constant byte address 0x4 - core index']
  #allocation1 [shape = 'u32[72,128]{1,0:T(1,128)}', space=vmem, size = 0x9000, scoped, tag = 'internal scratch']
  #allocation2 [shape = 'f32[16,32]{1,0:T(8,128)}', space=vmem, size = 0x2000, scoped, tag = 'scratch operand']
  #allocation3 [shape = 'f32[4,32]{1,0:T(4,128)}', space=vmem, size = 0x800, scoped, tag = 'scratch operand']
  %s0 = inlined_call_operand.vmem [shape: f32[2,16,32], index: 0, kind: input, shape index: {}]
  %s1 = inlined_call_operand.vmem [shape: f32[2,32], index: 1, kind: input, shape index: {}]
  %s2 = inlined_call_operand.vmem [shape: f32[2,32,384], index: 2, kind: input, shape index: {}]
  %s3 = inlined_call_operand.vmem [shape: f32[2,128,32], index: 3, kind: input, shape index: {}]
  %s4 = inlined_call_operand.vmem [shape: f32[2,1,608], index: 4, kind: input, shape index: {}]
  %s5 = inlined_call_operand.vmem [shape: f32[2,8,32], index: 5, kind: input, shape index: {}]
  %s6 = inlined_call_operand.vmem [shape: f32[2,4,8], index: 6, kind: input, shape index: {}]
  %s7 = inlined_call_operand.vmem [shape: f32[4,1], index: 7, kind: input, shape index: {}]
  %s8 = inlined_call_operand.vmem [shape: f32[4,32,32], index: 8, kind: input, shape index: {}]
  %s9 = inlined_call_operand.vmem [shape: f32[1,32], index: 9, kind: input, shape index: {}]
  %s10 = inlined_call_operand.hbm [shape: f32[2,1,32], index: 10, kind: output, shape index: {0}]
  %s11 = inlined_call_operand.vmem [shape: f32[2,2,8,16], index: 11, kind: output, shape index: {1}]
  %12 = xla_tuple %s10, %s11
  %s13 = sld [smem:[#allocation0]]
  $region89: #{boq_forward.1} parent=0
    _
  %s15 = ssub.s32 1, %s13
  %s16 = scalar_select 0, %s15, %s13
  $region1: #{boq_forward.1} parent=0
    #allocation4 [shape = 'u8[1024]{0}', space=vmem, size = 0x400, scoped, tag = 'output window, operand 0']
    #allocation5 [shape = 's32[2]{0}', space=sflag, size = 0x8, scoped, tag = 'scoped memory for boq_forward.1']
    %17 = vsyncpa [#allocation5], 0
    %s18 = scalar_lea.sflag [#allocation5], 1
    %19 = vsyncpa %s18, 0
    loop: start=0, step=1, limit=6
    $region2: #{boq_forward.1} parent=1 // loop_pre_header
      _
    $region3: #{boq_forward.1} parent=1 // loop_header
      %s21 = sphi 0, %s25
      %p22 = scmp.ge.s32.totalorder %s21, 6
      %s28 = sphi 0, %s40
      %s29 = sphi 0, %s36
      %s30 = sphi 0, %s28
      %s31 = sphi 0, %s29
      %s32 = sphi 0, %s30
      %s33 = sphi 0, %s31
      %s43 = sphi 0, %s45
      %s46 = sphi 0, %s43
      %s47 = sphi 0, %s46
      %s63 = sphi 0, %s47
      %s67 = sphi 0, %s67
      %s69 = sphi 0, %s67
      %s70 = sphi 0, %s69
      %s84 = sphi 0, %s70
      %s90 = sphi 0, %s92
      %s93 = sphi 0, %s90
      %s94 = sphi 0, %s93
      %s110 = sphi 0, %s94
      %s116 = sphi 0, %s118
      %s119 = sphi 0, %s116
      %s120 = sphi 0, %s119
      %s136 = sphi 0, %s120
      %s142 = sphi 0, %s144
      %s145 = sphi 0, %s142
      %s146 = sphi 0, %s145
      %s162 = sphi 0, %s146
      %s168 = sphi 0, %s170
      %s171 = sphi 0, %s168
      %s172 = sphi 0, %s171
      %s188 = sphi 0, %s172
      %s194 = sphi 0, %s196
      %s197 = sphi 0, %s194
      %s198 = sphi 0, %s197
      %s214 = sphi 0, %s198
      %s218 = sphi 0, %s218
      %s220 = sphi 0, %s218
      %s221 = sphi 0, %s220
      %s235 = sphi 0, %s221
      %s239 = sphi 0, %s239
      %s241 = sphi 0, %s239
      %s242 = sphi 0, %s241
      %s256 = sphi 0, %s242
      %s260 = sphi 0, %s260
      %s262 = sphi 0, %s260
      %s263 = sphi 0, %s262
      %s277 = sphi 0, %s263
      %s283 = sphi 0, %s285
      %s286 = sphi 0, %s283
      %s287 = sphi 0, %s286
      %s303 = sphi 0, %s287
      %s311 = sphi 0, %s313
      %s314 = sphi 0, %s311
      %s315 = sphi 0, %s314
      %s331 = sphi 0, %s315
    $region4: #{boq_forward.1} parent=1 // loop_header_branch
      %24 = sbr.rel (%p22) target = $region8
    $region5: #{boq_forward.1} parent=1 // loop_body
      %s26 = ssub.s32 %s21, 1
      %s27 = ssub.s32 %s21, 2
      %s34 = sadd.s32 1, %s29
      %p35 = scmp.ge.s32.totalorder %s34, 2
      %s36 = scalar_select %p35, 0, %s34
      %s37 = sadd.s32 1, %s28
      %s38 = scalar_select %p35, %s37, %s28
      %p39 = scmp.ge.s32.totalorder %s38, 2
      %s40 = scalar_select %p39, 0, %s38
      %s41 = ssub.s32 %s28, %s40
      %p42 = scmp.eq.s32.totalorder %s41, 0
      %s44 = sadd.s32 %s43, 1
      %s45 = scalar_select %p42, %s43, %s44
      %p48 = pneg %p42
      %p49 = scmp.eq.s32.totalorder %s21, 3
      %p50 = por %p48, %p49
      %p51 = scmp.ne.s32.totalorder %s43, %s46
      %p52 = scmp.eq.s32.totalorder %s21, 0
      %p53 = por %p51, %p52
      %p54 = scmp.ne.s32.totalorder %s43, %s46
      %p55 = scmp.eq.s32.totalorder %s26, 3
      %p56 = por %p54, %p55
      %p57 = scmp.ne.s32.totalorder %s46, %s47
      %p58 = scmp.eq.s32.totalorder %s26, 0
      %p59 = por %p57, %p58
      %p60 = scmp.ne.s32.totalorder %s46, %s47
      %p61 = scmp.eq.s32.totalorder %s27, 3
      %p62 = por %p60, %p61
      %p64 = scmp.ne.s32.totalorder %s47, %s63
      %p65 = scmp.eq.s32.totalorder %s27, 0
      %p66 = por %p64, %p65
      %s68 = sadd.s32 %s67, 1
      %p71 = scmp.eq.s32.totalorder %s21, 3
      %p72 = scmp.ne.s32.totalorder %s67, %s69
      %p73 = scmp.eq.s32.totalorder %s21, 0
      %p74 = por %p72, %p73
      %p75 = scmp.ne.s32.totalorder %s67, %s69
      %p76 = scmp.eq.s32.totalorder %s26, 3
      %p77 = por %p75, %p76
      %p78 = scmp.ne.s32.totalorder %s69, %s70
      %p79 = scmp.eq.s32.totalorder %s26, 0
      %p80 = por %p78, %p79
      %p81 = scmp.ne.s32.totalorder %s69, %s70
      %p82 = scmp.eq.s32.totalorder %s27, 3
      %p83 = por %p81, %p82
      %p85 = scmp.ne.s32.totalorder %s70, %s84
      %p86 = scmp.eq.s32.totalorder %s27, 0
      %p87 = por %p85, %p86
      %s88 = ssub.s32 %s29, %s36
      %p89 = scmp.eq.s32.totalorder %s88, 0
      %s91 = sadd.s32 %s90, 1
      %s92 = scalar_select %p89, %s90, %s91
      %p95 = pneg %p89
      %p96 = scmp.eq.s32.totalorder %s21, 3
      %p97 = por %p95, %p96
      %p98 = scmp.ne.s32.totalorder %s90, %s93
      %p99 = scmp.eq.s32.totalorder %s21, 0
      %p100 = por %p98, %p99
      %p101 = scmp.ne.s32.totalorder %s90, %s93
      %p102 = scmp.eq.s32.totalorder %s26, 3
      %p103 = por %p101, %p102
      %p104 = scmp.ne.s32.totalorder %s93, %s94
      %p105 = scmp.eq.s32.totalorder %s26, 0
      %p106 = por %p104, %p105
      %p107 = scmp.ne.s32.totalorder %s93, %s94
      %p108 = scmp.eq.s32.totalorder %s27, 3
      %p109 = por %p107, %p108
      %p111 = scmp.ne.s32.totalorder %s94, %s110
      %p112 = scmp.eq.s32.totalorder %s27, 0
      %p113 = por %p111, %p112
      %s114 = ssub.s32 %s29, %s36
      %p115 = scmp.eq.s32.totalorder %s114, 0
      %s117 = sadd.s32 %s116, 1
      %s118 = scalar_select %p115, %s116, %s117
      %p121 = pneg %p115
      %p122 = scmp.eq.s32.totalorder %s21, 3
      %p123 = por %p121, %p122
      %p124 = scmp.ne.s32.totalorder %s116, %s119
      %p125 = scmp.eq.s32.totalorder %s21, 0
      %p126 = por %p124, %p125
      %p127 = scmp.ne.s32.totalorder %s116, %s119
      %p128 = scmp.eq.s32.totalorder %s26, 3
      %p129 = por %p127, %p128
      %p130 = scmp.ne.s32.totalorder %s119, %s120
      %p131 = scmp.eq.s32.totalorder %s26, 0
      %p132 = por %p130, %p131
      %p133 = scmp.ne.s32.totalorder %s119, %s120
      %p134 = scmp.eq.s32.totalorder %s27, 3
      %p135 = por %p133, %p134
      %p137 = scmp.ne.s32.totalorder %s120, %s136
      %p138 = scmp.eq.s32.totalorder %s27, 0
      %p139 = por %p137, %p138
      %s140 = ssub.s32 %s29, %s36
      %p141 = scmp.eq.s32.totalorder %s140, 0
      %s143 = sadd.s32 %s142, 1
      %s144 = scalar_select %p141, %s142, %s143
      %p147 = pneg %p141
      %p148 = scmp.eq.s32.totalorder %s21, 3
      %p149 = por %p147, %p148
      %p150 = scmp.ne.s32.totalorder %s142, %s145
      %p151 = scmp.eq.s32.totalorder %s21, 0
      %p152 = por %p150, %p151
      %p153 = scmp.ne.s32.totalorder %s142, %s145
      %p154 = scmp.eq.s32.totalorder %s26, 3
      %p155 = por %p153, %p154
      %p156 = scmp.ne.s32.totalorder %s145, %s146
      %p157 = scmp.eq.s32.totalorder %s26, 0
      %p158 = por %p156, %p157
      %p159 = scmp.ne.s32.totalorder %s145, %s146
      %p160 = scmp.eq.s32.totalorder %s27, 3
      %p161 = por %p159, %p160
      %p163 = scmp.ne.s32.totalorder %s146, %s162
      %p164 = scmp.eq.s32.totalorder %s27, 0
      %p165 = por %p163, %p164
      %s166 = ssub.s32 %s29, %s36
      %p167 = scmp.eq.s32.totalorder %s166, 0
      %s169 = sadd.s32 %s168, 1
      %s170 = scalar_select %p167, %s168, %s169
      %p173 = pneg %p167
      %p174 = scmp.eq.s32.totalorder %s21, 3
      %p175 = por %p173, %p174
      %p176 = scmp.ne.s32.totalorder %s168, %s171
      %p177 = scmp.eq.s32.totalorder %s21, 0
      %p178 = por %p176, %p177
      %p179 = scmp.ne.s32.totalorder %s168, %s171
      %p180 = scmp.eq.s32.totalorder %s26, 3
      %p181 = por %p179, %p180
      %p182 = scmp.ne.s32.totalorder %s171, %s172
      %p183 = scmp.eq.s32.totalorder %s26, 0
      %p184 = por %p182, %p183
      %p185 = scmp.ne.s32.totalorder %s171, %s172
      %p186 = scmp.eq.s32.totalorder %s27, 3
      %p187 = por %p185, %p186
      %p189 = scmp.ne.s32.totalorder %s172, %s188
      %p190 = scmp.eq.s32.totalorder %s27, 0
      %p191 = por %p189, %p190
      %s192 = ssub.s32 %s29, %s36
      %p193 = scmp.eq.s32.totalorder %s192, 0
      %s195 = sadd.s32 %s194, 1
      %s196 = scalar_select %p193, %s194, %s195
      %p199 = pneg %p193
      %p200 = scmp.eq.s32.totalorder %s21, 3
      %p201 = por %p199, %p200
      %p202 = scmp.ne.s32.totalorder %s194, %s197
      %p203 = scmp.eq.s32.totalorder %s21, 0
      %p204 = por %p202, %p203
      %p205 = scmp.ne.s32.totalorder %s194, %s197
      %p206 = scmp.eq.s32.totalorder %s26, 3
      %p207 = por %p205, %p206
      %p208 = scmp.ne.s32.totalorder %s197, %s198
      %p209 = scmp.eq.s32.totalorder %s26, 0
      %p210 = por %p208, %p209
      %p211 = scmp.ne.s32.totalorder %s197, %s198
      %p212 = scmp.eq.s32.totalorder %s27, 3
      %p213 = por %p211, %p212
      %p215 = scmp.ne.s32.totalorder %s198, %s214
      %p216 = scmp.eq.s32.totalorder %s27, 0
      %p217 = por %p215, %p216
      %s219 = sadd.s32 %s218, 1
      %p222 = scmp.eq.s32.totalorder %s21, 3
      %p223 = scmp.ne.s32.totalorder %s218, %s220
      %p224 = scmp.eq.s32.totalorder %s21, 0
      %p225 = por %p223, %p224
      %p226 = scmp.ne.s32.totalorder %s218, %s220
      %p227 = scmp.eq.s32.totalorder %s26, 3
      %p228 = por %p226, %p227
      %p229 = scmp.ne.s32.totalorder %s220, %s221
      %p230 = scmp.eq.s32.totalorder %s26, 0
      %p231 = por %p229, %p230
      %p232 = scmp.ne.s32.totalorder %s220, %s221
      %p233 = scmp.eq.s32.totalorder %s27, 3
      %p234 = por %p232, %p233
      %p236 = scmp.ne.s32.totalorder %s221, %s235
      %p237 = scmp.eq.s32.totalorder %s27, 0
      %p238 = por %p236, %p237
      %s240 = sadd.s32 %s239, 1
      %p243 = scmp.eq.s32.totalorder %s21, 3
      %p244 = scmp.ne.s32.totalorder %s239, %s241
      %p245 = scmp.eq.s32.totalorder %s21, 0
      %p246 = por %p244, %p245
      %p247 = scmp.ne.s32.totalorder %s239, %s241
      %p248 = scmp.eq.s32.totalorder %s26, 3
      %p249 = por %p247, %p248
      %p250 = scmp.ne.s32.totalorder %s241, %s242
      %p251 = scmp.eq.s32.totalorder %s26, 0
      %p252 = por %p250, %p251
      %p253 = scmp.ne.s32.totalorder %s241, %s242
      %p254 = scmp.eq.s32.totalorder %s27, 3
      %p255 = por %p253, %p254
      %p257 = scmp.ne.s32.totalorder %s242, %s256
      %p258 = scmp.eq.s32.totalorder %s27, 0
      %p259 = por %p257, %p258
      %s261 = sadd.s32 %s260, 1
      %p264 = scmp.eq.s32.totalorder %s21, 3
      %p265 = scmp.ne.s32.totalorder %s260, %s262
      %p266 = scmp.eq.s32.totalorder %s21, 0
      %p267 = por %p265, %p266
      %p268 = scmp.ne.s32.totalorder %s260, %s262
      %p269 = scmp.eq.s32.totalorder %s26, 3
      %p270 = por %p268, %p269
      %p271 = scmp.ne.s32.totalorder %s262, %s263
      %p272 = scmp.eq.s32.totalorder %s26, 0
      %p273 = por %p271, %p272
      %p274 = scmp.ne.s32.totalorder %s262, %s263
      %p275 = scmp.eq.s32.totalorder %s27, 3
      %p276 = por %p274, %p275
      %p278 = scmp.ne.s32.totalorder %s263, %s277
      %p279 = scmp.eq.s32.totalorder %s27, 0
      %p280 = por %p278, %p279
      %s281 = ssub.s32 %s28, %s40
      %p282 = scmp.eq.s32.totalorder %s281, 0
      %s284 = sadd.s32 %s283, 1
      %s285 = scalar_select %p282, %s283, %s284
      %p288 = pneg %p282
      %p289 = scmp.eq.s32.totalorder %s21, 3
      %p290 = por %p288, %p289
      %p291 = scmp.ne.s32.totalorder %s283, %s286
      %p292 = scmp.eq.s32.totalorder %s21, 0
      %p293 = por %p291, %p292
      %p294 = scmp.ne.s32.totalorder %s283, %s286
      %p295 = scmp.eq.s32.totalorder %s26, 3
      %p296 = por %p294, %p295
      %p297 = scmp.ne.s32.totalorder %s286, %s287
      %p298 = scmp.eq.s32.totalorder %s26, 0
      %p299 = por %p297, %p298
      %p300 = scmp.ne.s32.totalorder %s286, %s287
      %p301 = scmp.eq.s32.totalorder %s27, 3
      %p302 = por %p300, %p301
      %p304 = scmp.ne.s32.totalorder %s287, %s303
      %p305 = scmp.eq.s32.totalorder %s27, 0
      %p306 = por %p304, %p305
      %s307 = ssub.s32 %s28, %s40
      %s308 = ssub.s32 %s29, %s36
      %s309 = sor.u32 %s307, %s308
      %p310 = scmp.eq.s32.totalorder %s309, 0
      %s312 = sadd.s32 %s311, 1
      %s313 = scalar_select %p310, %s311, %s312
      %p316 = pneg %p310
      %p317 = scmp.eq.s32.totalorder %s21, 3
      %p318 = por %p316, %p317
      %p319 = scmp.ne.s32.totalorder %s311, %s314
      %p320 = scmp.eq.s32.totalorder %s21, 0
      %p321 = por %p319, %p320
      %p322 = scmp.ne.s32.totalorder %s311, %s314
      %p323 = scmp.eq.s32.totalorder %s26, 3
      %p324 = por %p322, %p323
      %p325 = scmp.ne.s32.totalorder %s314, %s315
      %p326 = scmp.eq.s32.totalorder %s26, 0
      %p327 = por %p325, %p326
      %p328 = scmp.ne.s32.totalorder %s314, %s315
      %p329 = scmp.eq.s32.totalorder %s27, 3
      %p330 = por %p328, %p329
      %p332 = scmp.ne.s32.totalorder %s315, %s331
      %p333 = scmp.eq.s32.totalorder %s27, 0
      %p334 = por %p332, %p333
      %p335 = scmp.le.s32.totalorder 1, %s21
      %p336 = scmp.lt.s32.totalorder %s21, 5
      %p337 = pnand %p335, %p336
      %p338 = pneg %p337
      // Predicated region
      $region9: #{boq_forward.1} parent=5 // pred_check
        _
      $region10: #{boq_forward.1} parent=5 // pred_check_branch
        %340 = sbr.rel (%p337) target = $region12
      $region11: #{boq_forward.1} parent=5 // pred_region
        %s341 = ssub.s32 %s21, 1
        // Predicated region
        $region13: #{boq_forward.1} parent=11 // pred_check
          %p342 = pneg %p80
        $region14: #{boq_forward.1} parent=11 // pred_check_branch
          %344 = sbr.rel (%p342) target = $region16
        $region15: #{boq_forward.1} parent=11 // pred_region
          _
        $region16: #{boq_forward.1} parent=11 // pred_fallthru
          _
        // Predicated region
        $region17: #{boq_forward.1} parent=11 // pred_check
          %p345 = pneg %p231
        $region18: #{boq_forward.1} parent=11 // pred_check_branch
          %347 = sbr.rel (%p345) target = $region20
        $region19: #{boq_forward.1} parent=11 // pred_region
          _
        $region20: #{boq_forward.1} parent=11 // pred_fallthru
          _
        // Predicated region
        $region21: #{boq_forward.1} parent=11 // pred_check
          %p348 = pneg %p252
        $region22: #{boq_forward.1} parent=11 // pred_check_branch
          %350 = sbr.rel (%p348) target = $region24
        $region23: #{boq_forward.1} parent=11 // pred_region
          _
        $region24: #{boq_forward.1} parent=11 // pred_fallthru
          _
        // Predicated region
        $region25: #{boq_forward.1} parent=11 // pred_check
          %p351 = pneg %p273
        $region26: #{boq_forward.1} parent=11 // pred_check_branch
          %353 = sbr.rel (%p351) target = $region28
        $region27: #{boq_forward.1} parent=11 // pred_region
          _
        $region28: #{boq_forward.1} parent=11 // pred_fallthru
          _
      $region12: #{boq_forward.1} parent=5 // pred_fallthru
        _
      %p354 = scmp.lt.s32.totalorder %s21, 4
      // Predicated region
      $region29: #{boq_forward.1} parent=5 // pred_check
        %p355 = pneg %p354
      $region30: #{boq_forward.1} parent=5 // pred_check_branch
        %357 = sbr.rel (%p355) target = $region32
      $region31: #{boq_forward.1} parent=5 // pred_region
        // Predicated region
        $region33: #{boq_forward.1} parent=31 // pred_check
          %p358 = pneg %p53
        $region34: #{boq_forward.1} parent=31 // pred_check_branch
          %360 = sbr.rel (%p358) target = $region36
        $region35: #{boq_forward.1} parent=31 // pred_region
          %p361 = scmp.lt.s32.totalorder %s28, 1
          %s362 = scalar_select %p361, %s28, 1
          %s363 = smul.addr %s362, 2
          %s364 = smul.addr %s363, 8
          %s365 = scalar_lea.vmem %s0, %s364
        $region36: #{boq_forward.1} parent=31 // pred_fallthru
          _
        // Predicated region
        $region37: #{boq_forward.1} parent=31 // pred_check
          %p366 = pneg %p100
        $region38: #{boq_forward.1} parent=31 // pred_check_branch
          %368 = sbr.rel (%p366) target = $region40
        $region39: #{boq_forward.1} parent=31 // pred_region
          %p369 = scmp.lt.s32.totalorder %s29, 1
          %s370 = scalar_select %p369, %s29, 1
          %s371 = smul.addr %s370, 12
          %s372 = smul.addr %s371, 8
          %s373 = scalar_lea.vmem %s2, %s372
        $region40: #{boq_forward.1} parent=31 // pred_fallthru
          _
        // Predicated region
        $region41: #{boq_forward.1} parent=31 // pred_check
          %p374 = pneg %p126
        $region42: #{boq_forward.1} parent=31 // pred_check_branch
          %376 = sbr.rel (%p374) target = $region44
        $region43: #{boq_forward.1} parent=31 // pred_region
          %p377 = scmp.lt.s32.totalorder %s29, 1
          %s378 = scalar_select %p377, %s29, 1
          %s379 = smul.addr %s378, 16
          %s380 = smul.addr %s379, 8
          %s381 = scalar_lea.vmem %s3, %s380
        $region44: #{boq_forward.1} parent=31 // pred_fallthru
          _
        // Predicated region
        $region45: #{boq_forward.1} parent=31 // pred_check
          %p382 = pneg %p152
        $region46: #{boq_forward.1} parent=31 // pred_check_branch
          %384 = sbr.rel (%p382) target = $region48
        $region47: #{boq_forward.1} parent=31 // pred_region
          %p385 = scmp.lt.s32.totalorder %s29, 1
          %s386 = scalar_select %p385, %s29, 1
          %s387 = smul.addr %s386, 5
          %s388 = scalar_lea.vmem %s4, %s387
        $region48: #{boq_forward.1} parent=31 // pred_fallthru
          _
        // Predicated region
        $region49: #{boq_forward.1} parent=31 // pred_check
          %p389 = pneg %p178
        $region50: #{boq_forward.1} parent=31 // pred_check_branch
          %391 = sbr.rel (%p389) target = $region52
        $region51: #{boq_forward.1} parent=31 // pred_region
          %p392 = scmp.lt.s32.totalorder %s29, 1
          %s393 = scalar_select %p392, %s29, 1
          %s394 = smul.addr %s393, 8
          %s395 = scalar_lea.vmem %s5, %s394
        $region52: #{boq_forward.1} parent=31 // pred_fallthru
          _
        // Predicated region
        $region53: #{boq_forward.1} parent=31 // pred_check
          %p396 = pneg %p204
        $region54: #{boq_forward.1} parent=31 // pred_check_branch
          %398 = sbr.rel (%p396) target = $region56
        $region55: #{boq_forward.1} parent=31 // pred_region
          %p399 = scmp.lt.s32.totalorder %s29, 1
          %s400 = scalar_select %p399, %s29, 1
          %s401 = smul.addr %s400, 4
          %s402 = scalar_lea.vmem %s6, %s401
        $region56: #{boq_forward.1} parent=31 // pred_fallthru
          _
      $region32: #{boq_forward.1} parent=5 // pred_fallthru
        _
      %p403 = scmp.le.s32.totalorder 1, %s21
      %p404 = scmp.lt.s32.totalorder %s21, 5
      %p405 = pnand %p403, %p404
      %p406 = pneg %p405
      // Predicated region
      $region57: #{boq_forward.1} parent=5 // pred_check
        _
      $region58: #{boq_forward.1} parent=5 // pred_check_branch
        %408 = sbr.rel (%p405) target = $region60
      $region59: #{boq_forward.1} parent=5 // pred_region
        %s409 = ssub.s32 %s21, 1
        %p410 = scmp.lt.s32.totalorder %s30, 1
        %s411 = scalar_select %p410, %s30, 1
        %s412 = smul.addr %s411, 2
        %s413 = smul.addr %s412, 8
        %s414 = scalar_lea.vmem %s0, %s413
        %p415 = pneg %p59
        %p416 = pneg %p56
        %p417 = pneg %p80
        %p418 = pneg %p77
        %p419 = scmp.lt.s32.totalorder %s31, 1
        %s420 = scalar_select %p419, %s31, 1
        %s421 = smul.addr %s420, 12
        %s422 = smul.addr %s421, 8
        %s423 = scalar_lea.vmem %s2, %s422
        %p424 = pneg %p106
        %p425 = pneg %p103
        %p426 = scmp.lt.s32.totalorder %s31, 1
        %s427 = scalar_select %p426, %s31, 1
        %s428 = smul.addr %s427, 16
        %s429 = smul.addr %s428, 8
        %s430 = scalar_lea.vmem %s3, %s429
        %p431 = pneg %p132
        %p432 = pneg %p129
        %p433 = scmp.lt.s32.totalorder %s31, 1
        %s434 = scalar_select %p433, %s31, 1
        %s435 = smul.addr %s434, 5
        %s436 = scalar_lea.vmem %s4, %s435
        %p437 = pneg %p158
        %p438 = pneg %p155
        %p439 = scmp.lt.s32.totalorder %s31, 1
        %s440 = scalar_select %p439, %s31, 1
        %s441 = smul.addr %s440, 8
        %s442 = scalar_lea.vmem %s5, %s441
        %p443 = pneg %p184
        %p444 = pneg %p181
        %p445 = scmp.lt.s32.totalorder %s31, 1
        %s446 = scalar_select %p445, %s31, 1
        %s447 = smul.addr %s446, 4
        %s448 = scalar_lea.vmem %s6, %s447
        %p449 = pneg %p210
        %p450 = pneg %p207
        %p451 = pneg %p231
        %p452 = pneg %p228
        %p453 = pneg %p252
        %p454 = pneg %p249
        %p455 = pneg %p273
        %p456 = pneg %p270
        %p457 = pneg %p299
        %p458 = pneg %p296
        %s459 = sand.u32 %s286, 1
        %s460 = scalar_lea.sflag [#allocation5], %s459
        %s461 = sand.u32 %s286, 1
        %s462 = scalar_lea.vmem [#allocation4], %s461
        %p463 = pneg %p327
        %p464 = pneg %p324
        %p465 = scmp.lt.s32.totalorder %s30, 1
        %s466 = scalar_select %p465, %s30, 1
        %p467 = scmp.lt.s32.totalorder %s31, 1
        %s468 = scalar_select %p467, %s31, 1
        %s469 = smul.addr %s466, 2
        %s470 = sadd.s32 %s468, %s469
        %s471 = smul.addr %s470, 8
        %s472 = scalar_lea.vmem %s11, %s471
        %p473 = scmp.lt.s32.totalorder %s30, 1
        %s474 = scalar_select %p473, %s30, 1
        %s475 = smul.addr %s474, 2
        %s476 = smul.addr %s475, 8
        %s477 = scalar_lea.vmem %s0, %s476
        %p478 = scmp.lt.s32.totalorder %s31, 1
        %s479 = scalar_select %p478, %s31, 1
        %s480 = smul.addr %s479, 12
        %s481 = smul.addr %s480, 8
        %s482 = scalar_lea.vmem %s2, %s481
        %p483 = scmp.lt.s32.totalorder %s31, 1
        %s484 = scalar_select %p483, %s31, 1
        %s485 = smul.addr %s484, 16
        %s486 = smul.addr %s485, 8
        %s487 = scalar_lea.vmem %s3, %s486
        %p488 = scmp.lt.s32.totalorder %s31, 1
        %s489 = scalar_select %p488, %s31, 1
        %s490 = smul.addr %s489, 5
        %s491 = scalar_lea.vmem %s4, %s490
        %p492 = scmp.lt.s32.totalorder %s31, 1
        %s493 = scalar_select %p492, %s31, 1
        %s494 = smul.addr %s493, 8
        %s495 = scalar_lea.vmem %s5, %s494
        %p496 = scmp.lt.s32.totalorder %s31, 1
        %s497 = scalar_select %p496, %s31, 1
        %s498 = smul.addr %s497, 4
        %s499 = scalar_lea.vmem %s6, %s498
        %p500 = scmp.lt.s32.totalorder %s30, 1
        %s501 = scalar_select %p500, %s30, 1
        %p502 = scmp.lt.s32.totalorder %s31, 1
        %s503 = scalar_select %p502, %s31, 1
        %s504 = smul.addr %s501, 2
        %s505 = sadd.s32 %s503, %s504
        %s506 = smul.addr %s505, 8
        %s507 = scalar_lea.vmem %s11, %s506
        %p508 = scmp.eq.s32.totalorder %s31, 0
        // Predicated region
        $region61: #{boq_forward.1} parent=59 // pred_check
          %p509 = pneg %p508
        $region62: #{boq_forward.1} parent=59 // pred_check_branch
          %511 = sbr.rel (%p509) target = $region64
        $region63: #{boq_forward.1} parent=59 // pred_region
          %v512 = vld [vmem:[%s477] sm:$0xff]
          %v513 = vld [vmem:[%s477 + $0x8] sm:$0xff]
          %v514 = vld [vmem:[%s1] sm:$0x1]
          %v515 = vld [vmem:[%s1 + $0x1] sm:$0x1]
          %vm516 = vcmask 261120
          %v517 = vsel %vm516, %v512, 0.0
          %518 = vadd.xlane.f32.xlu0 %v517
          %v519 = vpop.xlane.xlu0 %518
          %v520 = vsel %vm516, %v513, 0.0
          %521 = vadd.xlane.f32.xlu0 %v520
          %v522 = vpop.xlane.xlu0 %521
          %v523 = vrcp.pop 32.0
          %v524 = vmul.f32 32.0, %v523
          %v525 = vsub.f32 1.0, %v524
          %v526 = vmul.f32 %v523, %v525
          %v527 = vadd.f32 %v523, %v526
          %vm528 = vweird.f32 %v523
          %v529 = vsel %vm528, %v523, %v527
          %v530 = vmul.f32 %v519, %v529
          %v531 = vmul.f32 %v522, %v529
          %v532 = vsub.f32 %v512, %v530
          %v533 = vsub.f32 %v513, %v531
          %v534 = vmul.f32 %v532, %v532
          %v535 = vmul.f32 %v533, %v533
          %v536 = vsel %vm516, %v534, 0.0
          %537 = vadd.xlane.f32.xlu0 %v536
          %v538 = vpop.xlane.xlu0 %537
          %v539 = vsel %vm516, %v535, 0.0
          %540 = vadd.xlane.f32.xlu0 %v539
          %v541 = vpop.xlane.xlu0 %540
          %v542 = vmul.f32 %v538, %v529
          %v543 = vmul.f32 %v541, %v529
          %v544 = vadd.f32 %v542, 1e-05
          %v545 = vadd.f32 %v543, 1e-05
          %v546 = vrsqrt.pop %v544
          %v547 = vmul.f32 %v546, %v544
          %v548 = vmul.f32 %v547, %v546
          %v549 = vmul.f32 0.5, %v548
          %v550 = vsub.f32 1.5, %v549
          %v551 = vmul.f32 %v546, %v550
          %vm552 = vweird.f32 %v544
          %vm553 = vweird.f32 %v546
          %vm554 = vmor %vm552, %vm553
          %v555 = vsel %vm554, %v546, %v551
          %v556 = vrsqrt.pop %v545
          %v557 = vmul.f32 %v556, %v545
          %v558 = vmul.f32 %v557, %v556
          %v559 = vmul.f32 0.5, %v558
          %v560 = vsub.f32 1.5, %v559
          %v561 = vmul.f32 %v556, %v560
          %vm562 = vweird.f32 %v545
          %vm563 = vweird.f32 %v556
          %vm564 = vmor %vm562, %vm563
          %v565 = vsel %vm564, %v556, %v561
          %v566 = vmul.f32 %v532, %v555
          %v567 = vmul.f32 %v533, %v565
          %v568 = vperm.slane %v514, 0
          %v569 = vmul.f32 %v566, %v568
          %v570 = vmul.f32 %v567, %v568
          %v571 = vperm.slane %v515, 0
          %v572 = vadd.f32 %v569, %v571
          %v573 = vadd.f32 %v570, %v571
          %574 = vst.msk [vmem:[#allocation2] sm:$0xff] %vm516, %v572
          %575 = vst.msk [vmem:[#allocation2 + $0x8] sm:$0xff] %vm516, %v573
          %vm576 = vcmask 257024
          %577 = vst.msk [vmem:[#allocation3] sm:$0xf] %vm576, 0.0
        $region64: #{boq_forward.1} parent=59 // pred_fallthru
          _
        %v578 = vld [vmem:[#allocation2] sm:$0xff]
        %v579 = vld [vmem:[#allocation2 + $0x8] sm:$0xff]
        %v580 = vld [vmem:[%s482] sm:$0xff]
        %v581 = vld [vmem:[%s482 + $0x18] sm:$0xff]
        %v582 = vld [vmem:[%s482 + $0x30] sm:$0xff]
        %v583 = vld [vmem:[%s482 + $0x48] sm:$0xff]
        %v584 = vld [vmem:[%s491] sm:$0x1]
        %v586 = vperm.slane %v584, 0
        %vm588 = vcmask 261120
        %v590 = vsel %vm588, %v578, 0
        %v593 = vsel %vm588, %v579, 0
        %595 = vmatpush.msra.mxu0 0.0
        %596 = vmatpush.msra.mxu0 0.0
        %597 = vmatpush.msra.mxu0 0.0
        %598 = vmatpush.msra.mxu0 0.0
        %599 = vmatpush.msra.mxu0 0.0
        %600 = vmatpush.msra.mxu0 0.0
        %601 = vmatpush.msra.mxu0 0.0
        %602 = vmatpush.msra.mxu0 0.0
        %603 = vmatpush.msra.mxu0 0.0
        %604 = vmatpush.msra.mxu0 0.0
        %605 = vmatpush.msra.mxu0 0.0
        %606 = vmatpush.msra.mxu0 0.0
        %607 = vmatpush.msra.mxu0 %v583
        %608 = vmatpush.msra.mxu0 %v582
        %609 = vmatpush.msra.mxu0 %v581
        %610 = vmatpush.msra.mxu0 %v580
        %611 = vmatmul.f32.gmra.mxu0 %v590
        %v612 = vpop.f32.mrf.mxu0
        %v613 = vadd.f32 %v586, %v612
        %614 = vmatmul.f32.gmra.mxu0 %v593
        %v615 = vpop.f32.mrf.mxu0
        %v616 = vadd.f32 %v586, %v615
        %617 = vdwg.mxu0
        %620 = vrot.lane.b32.xlu0 %v613, 96
        %v621 = vpop.permute.xlu0 %620
        %622 = vrot.lane.b32.xlu0 %v616, 96
        %v623 = vpop.permute.xlu0 %622
        %vm624 = vcmask 64512
        %v625 = vsel %vm624, %v613, 0
        %v627 = vsel %vm624, %v616, 0
        %v629 = vsel %vm624, %v621, 0
        %v631 = vsel %vm624, %v623, 0
        %633 = vmatpush.xpose.msra.mxu0 0.0
        %634 = vmatpush.xpose.msra.mxu0 0.0
        %635 = vmatpush.xpose.msra.mxu0 0.0
        %636 = vmatpush.xpose.msra.mxu0 0.0
        %637 = vmatpush.xpose.msra.mxu0 0.0
        %638 = vmatpush.xpose.msra.mxu0 0.0
        %639 = vmatpush.xpose.msra.mxu0 0.0
        %640 = vmatpush.xpose.msra.mxu0 0.0
        %641 = vmatpush.xpose.msra.mxu0 0.0
        %642 = vmatpush.xpose.msra.mxu0 0.0
        %643 = vmatpush.xpose.msra.mxu0 0.0
        %644 = vmatpush.xpose.msra.mxu0 0.0
        %645 = vmatpush.xpose.msra.mxu0 0.0
        %646 = vmatpush.xpose.msra.mxu0 0.0
        %647 = vmatpush.xpose.msra.mxu0 %v631
        %648 = vmatpush.xpose.msra.mxu0 %v629
        %649 = vmatmul.f32.gmra.mxu0 %v625
        %v650 = vpop.f32.mrf.mxu0
        %v651 = vadd.f32 0.0, %v650
        %652 = vmatmul.f32.gmra.mxu0 %v627
        %v653 = vpop.f32.mrf.mxu0
        %v654 = vadd.f32 0.0, %v653
        %655 = vdwg.mxu0
        %v656 = vmul.f32 %v651, 0.35355338
        %v657 = vmul.f32 %v654, 0.35355338
        %vm658 = vcmask 130048
        %v659 = vsel %vm658, %v656, -inf
        %660 = vmax.xlane.f32.xlu0 %v659
        %v661 = vpop.xlane.xlu0 %660
        %v662 = vsel %vm658, %v657, -inf
        %663 = vmax.xlane.f32.xlu0 %v662
        %v664 = vpop.xlane.xlu0 %663
        %v665 = vsub.f32 %v656, %v661
        %v666 = vsub.f32 %v657, %v664
        %v667 = vmul.f32 %v665, 1.442695
        %v668 = vpow.pop %v667
        %v669 = vmul.f32 %v666, 1.442695
        %v670 = vpow.pop %v669
        %v671 = vsel %vm658, %v668, 0.0
        %672 = vadd.xlane.f32.xlu0 %v671
        %v673 = vpop.xlane.xlu0 %672
        %v674 = vsel %vm658, %v670, 0.0
        %675 = vadd.xlane.f32.xlu0 %v674
        %v676 = vpop.xlane.xlu0 %675
        %v677 = vrcp.pop %v673
        %v678 = vmul.f32 %v673, %v677
        %v679 = vsub.f32 1.0, %v678
        %v680 = vmul.f32 %v677, %v679
        %v681 = vadd.f32 %v677, %v680
        %vm682 = vweird.f32 %v673
        %vm683 = vweird.f32 %v677
        %vm684 = vmor %vm682, %vm683
        %v685 = vsel %vm684, %v677, %v681
        %v686 = vand.u32 2147483647, %v673
        %vm687 = vcmp.eq.f32.partialorder %v686, 8.507059e+37
        %v688 = vand.u32 %v673, 2147483648
        %v689 = vor.u32 1.1754944e-38, %v688
        %v690 = vsel %vm687, %v689, %v685
        %v691 = vmul.f32 %v668, %v690
        %v692 = vrcp.pop %v676
        %v693 = vmul.f32 %v676, %v692
        %v694 = vsub.f32 1.0, %v693
        %v695 = vmul.f32 %v692, %v694
        %v696 = vadd.f32 %v692, %v695
        %vm697 = vweird.f32 %v676
        %vm698 = vweird.f32 %v692
        %vm699 = vmor %vm697, %vm698
        %v700 = vsel %vm699, %v692, %v696
        %v701 = vand.u32 2147483647, %v676
        %vm702 = vcmp.eq.f32.partialorder %v701, 8.507059e+37
        %v703 = vand.u32 %v676, 2147483648
        %v704 = vor.u32 1.1754944e-38, %v703
        %v705 = vsel %vm702, %v704, %v700
        %v706 = vmul.f32 %v670, %v705
        %707 = vrot.lane.b32.xlu0 %v613, 64
        %v708 = vpop.permute.xlu0 %707
        %709 = vrot.lane.b32.xlu0 %v616, 64
        %v710 = vpop.permute.xlu0 %709
        %v714 = vsel %vm658, %v691, 0
        %v717 = vsel %vm658, %v706, 0
        %719 = vmatpush.msra.mxu0 0.0
        %720 = vmatpush.msra.mxu0 0.0
        %721 = vmatpush.msra.mxu0 0.0
        %722 = vmatpush.msra.mxu0 0.0
        %723 = vmatpush.msra.mxu0 0.0
        %724 = vmatpush.msra.mxu0 0.0
        %725 = vmatpush.msra.mxu0 0.0
        %726 = vmatpush.msra.mxu0 0.0
        %727 = vmatpush.msra.mxu0 0.0
        %728 = vmatpush.msra.mxu0 0.0
        %729 = vmatpush.msra.mxu0 0.0
        %730 = vmatpush.msra.mxu0 0.0
        %731 = vmatpush.msra.mxu0 0.0
        %732 = vmatpush.msra.mxu0 0.0
        %733 = vmatpush.msra.mxu0 %v710
        %734 = vmatpush.msra.mxu0 %v708
        %735 = vmatmul.f32.gmra.mxu0 %v714
        %v736 = vpop.f32.mrf.mxu0
        %v737 = vadd.f32 0.0, %v736
        %738 = vmatmul.f32.gmra.mxu0 %v717
        %v739 = vpop.f32.mrf.mxu0
        %v740 = vadd.f32 0.0, %v739
        %741 = vdwg.mxu0
        %742 = vrot.lane.b32.xlu0 %v613, 120
        %v743 = vpop.permute.xlu0 %742
        %744 = vrot.lane.b32.xlu0 %v616, 120
        %v745 = vpop.permute.xlu0 %744
        %746 = vrot.lane.b32.xlu0 %v613, 88
        %v747 = vpop.permute.xlu0 %746
        %748 = vrot.lane.b32.xlu0 %v616, 88
        %v749 = vpop.permute.xlu0 %748
        %v750 = vsel %vm624, %v743, 0
        %v752 = vsel %vm624, %v745, 0
        %v754 = vsel %vm624, %v747, 0
        %v756 = vsel %vm624, %v749, 0
        %758 = vmatpush.xpose.msra.mxu0 0.0
        %759 = vmatpush.xpose.msra.mxu0 0.0
        %760 = vmatpush.xpose.msra.mxu0 0.0
        %761 = vmatpush.xpose.msra.mxu0 0.0
        %762 = vmatpush.xpose.msra.mxu0 0.0
        %763 = vmatpush.xpose.msra.mxu0 0.0
        %764 = vmatpush.xpose.msra.mxu0 0.0
        %765 = vmatpush.xpose.msra.mxu0 0.0
        %766 = vmatpush.xpose.msra.mxu0 0.0
        %767 = vmatpush.xpose.msra.mxu0 0.0
        %768 = vmatpush.xpose.msra.mxu0 0.0
        %769 = vmatpush.xpose.msra.mxu0 0.0
        %770 = vmatpush.xpose.msra.mxu0 0.0
        %771 = vmatpush.xpose.msra.mxu0 0.0
        %772 = vmatpush.xpose.msra.mxu0 %v756
        %773 = vmatpush.xpose.msra.mxu0 %v754
        %774 = vmatmul.f32.gmra.mxu0 %v750
        %v775 = vpop.f32.mrf.mxu0
        %v776 = vadd.f32 0.0, %v775
        %777 = vmatmul.f32.gmra.mxu0 %v752
        %v778 = vpop.f32.mrf.mxu0
        %v779 = vadd.f32 0.0, %v778
        %780 = vdwg.mxu0
        %v781 = vmul.f32 %v776, 0.35355338
        %v782 = vmul.f32 %v779, 0.35355338
        %v783 = vsel %vm658, %v781, -inf
        %784 = vmax.xlane.f32.xlu0 %v783
        %v785 = vpop.xlane.xlu0 %784
        %v786 = vsel %vm658, %v782, -inf
        %787 = vmax.xlane.f32.xlu0 %v786
        %v788 = vpop.xlane.xlu0 %787
        %v789 = vsub.f32 %v781, %v785
        %v790 = vsub.f32 %v782, %v788
        %v791 = vmul.f32 %v789, 1.442695
        %v792 = vpow.pop %v791
        %v793 = vmul.f32 %v790, 1.442695
        %v794 = vpow.pop %v793
        %v795 = vsel %vm658, %v792, 0.0
        %796 = vadd.xlane.f32.xlu0 %v795
        %v797 = vpop.xlane.xlu0 %796
        %v798 = vsel %vm658, %v794, 0.0
        %799 = vadd.xlane.f32.xlu0 %v798
        %v800 = vpop.xlane.xlu0 %799
        %v801 = vrcp.pop %v797
        %v802 = vmul.f32 %v797, %v801
        %v803 = vsub.f32 1.0, %v802
        %v804 = vmul.f32 %v801, %v803
        %v805 = vadd.f32 %v801, %v804
        %vm806 = vweird.f32 %v797
        %vm807 = vweird.f32 %v801
        %vm808 = vmor %vm806, %vm807
        %v809 = vsel %vm808, %v801, %v805
        %v810 = vand.u32 2147483647, %v797
        %vm811 = vcmp.eq.f32.partialorder %v810, 8.507059e+37
        %v812 = vand.u32 %v797, 2147483648
        %v813 = vor.u32 1.1754944e-38, %v812
        %v814 = vsel %vm811, %v813, %v809
        %v815 = vmul.f32 %v792, %v814
        %v816 = vrcp.pop %v800
        %v817 = vmul.f32 %v800, %v816
        %v818 = vsub.f32 1.0, %v817
        %v819 = vmul.f32 %v816, %v818
        %v820 = vadd.f32 %v816, %v819
        %vm821 = vweird.f32 %v800
        %vm822 = vweird.f32 %v816
        %vm823 = vmor %vm821, %vm822
        %v824 = vsel %vm823, %v816, %v820
        %v825 = vand.u32 2147483647, %v800
        %vm826 = vcmp.eq.f32.partialorder %v825, 8.507059e+37
        %v827 = vand.u32 %v800, 2147483648
        %v828 = vor.u32 1.1754944e-38, %v827
        %v829 = vsel %vm826, %v828, %v824
        %v830 = vmul.f32 %v794, %v829
        %831 = vrot.lane.b32.xlu0 %v613, 56
        %v832 = vpop.permute.xlu0 %831
        %833 = vrot.lane.b32.xlu0 %v616, 56
        %v834 = vpop.permute.xlu0 %833
        %v838 = vsel %vm658, %v815, 0
        %v841 = vsel %vm658, %v830, 0
        %843 = vmatpush.msra.mxu0 0.0
        %844 = vmatpush.msra.mxu0 0.0
        %845 = vmatpush.msra.mxu0 0.0
        %846 = vmatpush.msra.mxu0 0.0
        %847 = vmatpush.msra.mxu0 0.0
        %848 = vmatpush.msra.mxu0 0.0
        %849 = vmatpush.msra.mxu0 0.0
        %850 = vmatpush.msra.mxu0 0.0
        %851 = vmatpush.msra.mxu0 0.0
        %852 = vmatpush.msra.mxu0 0.0
        %853 = vmatpush.msra.mxu0 0.0
        %854 = vmatpush.msra.mxu0 0.0
        %855 = vmatpush.msra.mxu0 0.0
        %856 = vmatpush.msra.mxu0 0.0
        %857 = vmatpush.msra.mxu0 %v834
        %858 = vmatpush.msra.mxu0 %v832
        %859 = vmatmul.f32.gmra.mxu0 %v838
        %v860 = vpop.f32.mrf.mxu0
        %v861 = vadd.f32 0.0, %v860
        %862 = vmatmul.f32.gmra.mxu0 %v841
        %v863 = vpop.f32.mrf.mxu0
        %v864 = vadd.f32 0.0, %v863
        %865 = vdwg.mxu0
        %866 = vrot.lane.b32.xlu0 %v613, 112
        %v867 = vpop.permute.xlu0 %866
        %868 = vrot.lane.b32.xlu0 %v616, 112
        %v869 = vpop.permute.xlu0 %868
        %870 = vrot.lane.b32.xlu0 %v613, 80
        %v871 = vpop.permute.xlu0 %870
        %872 = vrot.lane.b32.xlu0 %v616, 80
        %v873 = vpop.permute.xlu0 %872
        %v874 = vsel %vm624, %v867, 0
        %v876 = vsel %vm624, %v869, 0
        %v878 = vsel %vm624, %v871, 0
        %v880 = vsel %vm624, %v873, 0
        %882 = vmatpush.xpose.msra.mxu0 0.0
        %883 = vmatpush.xpose.msra.mxu0 0.0
        %884 = vmatpush.xpose.msra.mxu0 0.0
        %885 = vmatpush.xpose.msra.mxu0 0.0
        %886 = vmatpush.xpose.msra.mxu0 0.0
        %887 = vmatpush.xpose.msra.mxu0 0.0
        %888 = vmatpush.xpose.msra.mxu0 0.0
        %889 = vmatpush.xpose.msra.mxu0 0.0
        %890 = vmatpush.xpose.msra.mxu0 0.0
        %891 = vmatpush.xpose.msra.mxu0 0.0
        %892 = vmatpush.xpose.msra.mxu0 0.0
        %893 = vmatpush.xpose.msra.mxu0 0.0
        %894 = vmatpush.xpose.msra.mxu0 0.0
        %895 = vmatpush.xpose.msra.mxu0 0.0
        %896 = vmatpush.xpose.msra.mxu0 %v880
        %897 = vmatpush.xpose.msra.mxu0 %v878
        %898 = vmatmul.f32.gmra.mxu0 %v874
        %v899 = vpop.f32.mrf.mxu0
        %v900 = vadd.f32 0.0, %v899
        %901 = vmatmul.f32.gmra.mxu0 %v876
        %v902 = vpop.f32.mrf.mxu0
        %v903 = vadd.f32 0.0, %v902
        %904 = vdwg.mxu0
        %v905 = vmul.f32 %v900, 0.35355338
        %v906 = vmul.f32 %v903, 0.35355338
        %v907 = vsel %vm658, %v905, -inf
        %908 = vmax.xlane.f32.xlu0 %v907
        %v909 = vpop.xlane.xlu0 %908
        %v910 = vsel %vm658, %v906, -inf
        %911 = vmax.xlane.f32.xlu0 %v910
        %v912 = vpop.xlane.xlu0 %911
        %v913 = vsub.f32 %v905, %v909
        %v914 = vsub.f32 %v906, %v912
        %v915 = vmul.f32 %v913, 1.442695
        %v916 = vpow.pop %v915
        %v917 = vmul.f32 %v914, 1.442695
        %v918 = vpow.pop %v917
        %v919 = vsel %vm658, %v916, 0.0
        %920 = vadd.xlane.f32.xlu0 %v919
        %v921 = vpop.xlane.xlu0 %920
        %v922 = vsel %vm658, %v918, 0.0
        %923 = vadd.xlane.f32.xlu0 %v922
        %v924 = vpop.xlane.xlu0 %923
        %v925 = vrcp.pop %v921
        %v926 = vmul.f32 %v921, %v925
        %v927 = vsub.f32 1.0, %v926
        %v928 = vmul.f32 %v925, %v927
        %v929 = vadd.f32 %v925, %v928
        %vm930 = vweird.f32 %v921
        %vm931 = vweird.f32 %v925
        %vm932 = vmor %vm930, %vm931
        %v933 = vsel %vm932, %v925, %v929
        %v934 = vand.u32 2147483647, %v921
        %vm935 = vcmp.eq.f32.partialorder %v934, 8.507059e+37
        %v936 = vand.u32 %v921, 2147483648
        %v937 = vor.u32 1.1754944e-38, %v936
        %v938 = vsel %vm935, %v937, %v933
        %v939 = vmul.f32 %v916, %v938
        %v940 = vrcp.pop %v924
        %v941 = vmul.f32 %v924, %v940
        %v942 = vsub.f32 1.0, %v941
        %v943 = vmul.f32 %v940, %v942
        %v944 = vadd.f32 %v940, %v943
        %vm945 = vweird.f32 %v924
        %vm946 = vweird.f32 %v940
        %vm947 = vmor %vm945, %vm946
        %v948 = vsel %vm947, %v940, %v944
        %v949 = vand.u32 2147483647, %v924
        %vm950 = vcmp.eq.f32.partialorder %v949, 8.507059e+37
        %v951 = vand.u32 %v924, 2147483648
        %v952 = vor.u32 1.1754944e-38, %v951
        %v953 = vsel %vm950, %v952, %v948
        %v954 = vmul.f32 %v918, %v953
        %955 = vrot.lane.b32.xlu0 %v613, 48
        %v956 = vpop.permute.xlu0 %955
        %957 = vrot.lane.b32.xlu0 %v616, 48
        %v958 = vpop.permute.xlu0 %957
        %v962 = vsel %vm658, %v939, 0
        %v965 = vsel %vm658, %v954, 0
        %967 = vmatpush.msra.mxu0 0.0
        %968 = vmatpush.msra.mxu0 0.0
        %969 = vmatpush.msra.mxu0 0.0
        %970 = vmatpush.msra.mxu0 0.0
        %971 = vmatpush.msra.mxu0 0.0
        %972 = vmatpush.msra.mxu0 0.0
        %973 = vmatpush.msra.mxu0 0.0
        %974 = vmatpush.msra.mxu0 0.0
        %975 = vmatpush.msra.mxu0 0.0
        %976 = vmatpush.msra.mxu0 0.0
        %977 = vmatpush.msra.mxu0 0.0
        %978 = vmatpush.msra.mxu0 0.0
        %979 = vmatpush.msra.mxu0 0.0
        %980 = vmatpush.msra.mxu0 0.0
        %981 = vmatpush.msra.mxu0 %v958
        %982 = vmatpush.msra.mxu0 %v956
        %983 = vmatmul.f32.gmra.mxu0 %v962
        %v984 = vpop.f32.mrf.mxu0
        %v985 = vadd.f32 0.0, %v984
        %986 = vmatmul.f32.gmra.mxu0 %v965
        %v987 = vpop.f32.mrf.mxu0
        %v988 = vadd.f32 0.0, %v987
        %989 = vdwg.mxu0
        %990 = vrot.lane.b32.xlu0 %v613, 104
        %v991 = vpop.permute.xlu0 %990
        %992 = vrot.lane.b32.xlu0 %v616, 104
        %v993 = vpop.permute.xlu0 %992
        %994 = vrot.lane.b32.xlu0 %v613, 72
        %v995 = vpop.permute.xlu0 %994
        %996 = vrot.lane.b32.xlu0 %v616, 72
        %v997 = vpop.permute.xlu0 %996
        %v998 = vsel %vm624, %v991, 0
        %v1000 = vsel %vm624, %v993, 0
        %v1002 = vsel %vm624, %v995, 0
        %v1004 = vsel %vm624, %v997, 0
        %1006 = vmatpush.xpose.msra.mxu0 0.0
        %1007 = vmatpush.xpose.msra.mxu0 0.0
        %1008 = vmatpush.xpose.msra.mxu0 0.0
        %1009 = vmatpush.xpose.msra.mxu0 0.0
        %1010 = vmatpush.xpose.msra.mxu0 0.0
        %1011 = vmatpush.xpose.msra.mxu0 0.0
        %1012 = vmatpush.xpose.msra.mxu0 0.0
        %1013 = vmatpush.xpose.msra.mxu0 0.0
        %1014 = vmatpush.xpose.msra.mxu0 0.0
        %1015 = vmatpush.xpose.msra.mxu0 0.0
        %1016 = vmatpush.xpose.msra.mxu0 0.0
        %1017 = vmatpush.xpose.msra.mxu0 0.0
        %1018 = vmatpush.xpose.msra.mxu0 0.0
        %1019 = vmatpush.xpose.msra.mxu0 0.0
        %1020 = vmatpush.xpose.msra.mxu0 %v1004
        %1021 = vmatpush.xpose.msra.mxu0 %v1002
        %1022 = vmatmul.f32.gmra.mxu0 %v998
        %v1023 = vpop.f32.mrf.mxu0
        %v1024 = vadd.f32 0.0, %v1023
        %1025 = vmatmul.f32.gmra.mxu0 %v1000
        %v1026 = vpop.f32.mrf.mxu0
        %v1027 = vadd.f32 0.0, %v1026
        %1028 = vdwg.mxu0
        %v1029 = vmul.f32 %v1024, 0.35355338
        %v1030 = vmul.f32 %v1027, 0.35355338
        %v1031 = vsel %vm658, %v1029, -inf
        %1032 = vmax.xlane.f32.xlu0 %v1031
        %v1033 = vpop.xlane.xlu0 %1032
        %v1034 = vsel %vm658, %v1030, -inf
        %1035 = vmax.xlane.f32.xlu0 %v1034
        %v1036 = vpop.xlane.xlu0 %1035
        %v1037 = vsub.f32 %v1029, %v1033
        %v1038 = vsub.f32 %v1030, %v1036
        %v1039 = vmul.f32 %v1037, 1.442695
        %v1040 = vpow.pop %v1039
        %v1041 = vmul.f32 %v1038, 1.442695
        %v1042 = vpow.pop %v1041
        %v1043 = vsel %vm658, %v1040, 0.0
        %1044 = vadd.xlane.f32.xlu0 %v1043
        %v1045 = vpop.xlane.xlu0 %1044
        %v1046 = vsel %vm658, %v1042, 0.0
        %1047 = vadd.xlane.f32.xlu0 %v1046
        %v1048 = vpop.xlane.xlu0 %1047
        %v1049 = vrcp.pop %v1045
        %v1050 = vmul.f32 %v1045, %v1049
        %v1051 = vsub.f32 1.0, %v1050
        %v1052 = vmul.f32 %v1049, %v1051
        %v1053 = vadd.f32 %v1049, %v1052
        %vm1054 = vweird.f32 %v1045
        %vm1055 = vweird.f32 %v1049
        %vm1056 = vmor %vm1054, %vm1055
        %v1057 = vsel %vm1056, %v1049, %v1053
        %v1058 = vand.u32 2147483647, %v1045
        %vm1059 = vcmp.eq.f32.partialorder %v1058, 8.507059e+37
        %v1060 = vand.u32 %v1045, 2147483648
        %v1061 = vor.u32 1.1754944e-38, %v1060
        %v1062 = vsel %vm1059, %v1061, %v1057
        %v1063 = vmul.f32 %v1040, %v1062
        %v1064 = vrcp.pop %v1048
        %v1065 = vmul.f32 %v1048, %v1064
        %v1066 = vsub.f32 1.0, %v1065
        %v1067 = vmul.f32 %v1064, %v1066
        %v1068 = vadd.f32 %v1064, %v1067
        %vm1069 = vweird.f32 %v1048
        %vm1070 = vweird.f32 %v1064
        %vm1071 = vmor %vm1069, %vm1070
        %v1072 = vsel %vm1071, %v1064, %v1068
        %v1073 = vand.u32 2147483647, %v1048
        %vm1074 = vcmp.eq.f32.partialorder %v1073, 8.507059e+37
        %v1075 = vand.u32 %v1048, 2147483648
        %v1076 = vor.u32 1.1754944e-38, %v1075
        %v1077 = vsel %vm1074, %v1076, %v1072
        %v1078 = vmul.f32 %v1042, %v1077
        %1079 = vrot.lane.b32.xlu0 %v613, 40
        %v1080 = vpop.permute.xlu0 %1079
        %1081 = vrot.lane.b32.xlu0 %v616, 40
        %v1082 = vpop.permute.xlu0 %1081
        %v1086 = vsel %vm658, %v1063, 0
        %v1089 = vsel %vm658, %v1078, 0
        %1091 = vmatpush.msra.mxu0 0.0
        %1092 = vmatpush.msra.mxu0 0.0
        %1093 = vmatpush.msra.mxu0 0.0
        %1094 = vmatpush.msra.mxu0 0.0
        %1095 = vmatpush.msra.mxu0 0.0
        %1096 = vmatpush.msra.mxu0 0.0
        %1097 = vmatpush.msra.mxu0 0.0
        %1098 = vmatpush.msra.mxu0 0.0
        %1099 = vmatpush.msra.mxu0 0.0
        %1100 = vmatpush.msra.mxu0 0.0
        %1101 = vmatpush.msra.mxu0 0.0
        %1102 = vmatpush.msra.mxu0 0.0
        %1103 = vmatpush.msra.mxu0 0.0
        %1104 = vmatpush.msra.mxu0 0.0
        %1105 = vmatpush.msra.mxu0 %v1082
        %1106 = vmatpush.msra.mxu0 %v1080
        %1107 = vmatmul.f32.gmra.mxu0 %v1086
        %v1108 = vpop.f32.mrf.mxu0
        %v1109 = vadd.f32 0.0, %v1108
        %1110 = vmatmul.f32.gmra.mxu0 %v1089
        %v1111 = vpop.f32.mrf.mxu0
        %v1112 = vadd.f32 0.0, %v1111
        %1113 = vdwg.mxu0
        %1116 = vrot.lane.b32.xlu0 %v861, 8
        %v1117 = vpop.permute.xlu0 %1116
        %1118 = vrot.lane.b32.xlu0 %v864, 8
        %v1119 = vpop.permute.xlu0 %1118
        %1124 = vrot.lane.b32.xlu0 %v985, 16
        %v1125 = vpop.permute.xlu0 %1124
        %1126 = vrot.lane.b32.xlu0 %v988, 16
        %v1127 = vpop.permute.xlu0 %1126
        %1132 = vrot.lane.b32.xlu0 %v1109, 24
        %v1133 = vpop.permute.xlu0 %1132
        %1134 = vrot.lane.b32.xlu0 %v1112, 24
        %v1135 = vpop.permute.xlu0 %1134
        %v1138 = vsel %vm624, %v737, %v1117
        %v1139 = vsel %vm624, %v740, %v1119
        %v1140 = vsel %vm658, %v1138, %v1125
        %v1141 = vsel %vm658, %v1139, %v1127
        %vm1142 = vcmask 195584
        %v1143 = vsel %vm1142, %v1140, %v1133
        %v1144 = vsel %vm1142, %v1141, %v1135
        %1149 = vrot.lane.b32.xlu0 %v580, 32
        %v1150 = vpop.permute.xlu0 %1149
        %1151 = vrot.lane.b32.xlu0 %v581, 32
        %v1152 = vpop.permute.xlu0 %1151
        %1153 = vrot.lane.b32.xlu0 %v582, 32
        %v1154 = vpop.permute.xlu0 %1153
        %1155 = vrot.lane.b32.xlu0 %v583, 32
        %v1156 = vpop.permute.xlu0 %1155
        %1161 = vrot.lane.b32.xlu0 %v586, 32
        %v1162 = vpop.permute.xlu0 %1161
        %v1165 = vsel %vm588, %v1143, 0
        %v1168 = vsel %vm588, %v1144, 0
        %1170 = vmatpush.msra.mxu0 0.0
        %1171 = vmatpush.msra.mxu0 0.0
        %1172 = vmatpush.msra.mxu0 0.0
        %1173 = vmatpush.msra.mxu0 0.0
        %1174 = vmatpush.msra.mxu0 0.0
        %1175 = vmatpush.msra.mxu0 0.0
        %1176 = vmatpush.msra.mxu0 0.0
        %1177 = vmatpush.msra.mxu0 0.0
        %1178 = vmatpush.msra.mxu0 0.0
        %1179 = vmatpush.msra.mxu0 0.0
        %1180 = vmatpush.msra.mxu0 0.0
        %1181 = vmatpush.msra.mxu0 0.0
        %1182 = vmatpush.msra.mxu0 %v1156
        %1183 = vmatpush.msra.mxu0 %v1154
        %1184 = vmatpush.msra.mxu0 %v1152
        %1185 = vmatpush.msra.mxu0 %v1150
        %1186 = vmatmul.f32.gmra.mxu0 %v1165
        %v1187 = vpop.f32.mrf.mxu0
        %v1188 = vadd.f32 %v1162, %v1187
        %1189 = vmatmul.f32.gmra.mxu0 %v1168
        %v1190 = vpop.f32.mrf.mxu0
        %v1191 = vadd.f32 %v1162, %v1190
        %1192 = vdwg.mxu0
        %v1193 = vadd.f32 %v578, %v1188
        %v1194 = vadd.f32 %v579, %v1191
        %v1195 = vld [vmem:[%s491 + $0x1] sm:$0x1]
        %v1196 = vsel %vm588, %v1193, 0.0
        %1197 = vadd.xlane.f32.xlu0 %v1196
        %v1198 = vpop.xlane.xlu0 %1197
        %v1199 = vsel %vm588, %v1194, 0.0
        %1200 = vadd.xlane.f32.xlu0 %v1199
        %v1201 = vpop.xlane.xlu0 %1200
        %v1202 = vrcp.pop 32.0
        %v1203 = vmul.f32 32.0, %v1202
        %v1204 = vsub.f32 1.0, %v1203
        %v1205 = vmul.f32 %v1202, %v1204
        %v1206 = vadd.f32 %v1202, %v1205
        %vm1207 = vweird.f32 %v1202
        %v1208 = vsel %vm1207, %v1202, %v1206
        %v1209 = vmul.f32 %v1198, %v1208
        %v1210 = vmul.f32 %v1201, %v1208
        %v1211 = vsub.f32 %v1193, %v1209
        %v1212 = vsub.f32 %v1194, %v1210
        %v1213 = vmul.f32 %v1211, %v1211
        %v1214 = vmul.f32 %v1212, %v1212
        %v1215 = vsel %vm588, %v1213, 0.0
        %1216 = vadd.xlane.f32.xlu0 %v1215
        %v1217 = vpop.xlane.xlu0 %1216
        %v1218 = vsel %vm588, %v1214, 0.0
        %1219 = vadd.xlane.f32.xlu0 %v1218
        %v1220 = vpop.xlane.xlu0 %1219
        %v1221 = vmul.f32 %v1217, %v1208
        %v1222 = vmul.f32 %v1220, %v1208
        %v1223 = vadd.f32 %v1221, 1e-05
        %v1224 = vadd.f32 %v1222, 1e-05
        %v1225 = vrsqrt.pop %v1223
        %v1226 = vmul.f32 %v1225, %v1223
        %v1227 = vmul.f32 %v1226, %v1225
        %v1228 = vmul.f32 0.5, %v1227
        %v1229 = vsub.f32 1.5, %v1228
        %v1230 = vmul.f32 %v1225, %v1229
        %vm1231 = vweird.f32 %v1223
        %vm1232 = vweird.f32 %v1225
        %vm1233 = vmor %vm1231, %vm1232
        %v1234 = vsel %vm1233, %v1225, %v1230
        %v1235 = vrsqrt.pop %v1224
        %v1236 = vmul.f32 %v1235, %v1224
        %v1237 = vmul.f32 %v1236, %v1235
        %v1238 = vmul.f32 0.5, %v1237
        %v1239 = vsub.f32 1.5, %v1238
        %v1240 = vmul.f32 %v1235, %v1239
        %vm1241 = vweird.f32 %v1224
        %vm1242 = vweird.f32 %v1235
        %vm1243 = vmor %vm1241, %vm1242
        %v1244 = vsel %vm1243, %v1235, %v1240
        %v1245 = vmul.f32 %v1211, %v1234
        %v1246 = vmul.f32 %v1212, %v1244
        %v1248 = vperm.slane %v1195, 0
        %v1250 = vmul.f32 %v1245, %v1248
        %v1251 = vmul.f32 %v1246, %v1248
        %1252 = vrot.lane.b32.xlu0 %v1248, 96
        %v1253 = vpop.permute.xlu0 %1252
        %v1255 = vadd.f32 %v1250, %v1253
        %v1256 = vadd.f32 %v1251, %v1253
        %v1257 = vld [vmem:[%s482 + $0x8] sm:$0xff]
        %v1258 = vld [vmem:[%s482 + $0x20] sm:$0xff]
        %v1259 = vld [vmem:[%s482 + $0x38] sm:$0xff]
        %v1260 = vld [vmem:[%s482 + $0x50] sm:$0xff]
        %v1261 = vld [vmem:[%s491 + $0x1] sm:$0x3]
        %v1263 = vperm.slane %v1261, 0
        %v1264 = vperm.slane %v1261, 1
        %1265 = vrot.lane.b32.xlu0 %v1263, 64
        %v1266 = vpop.permute.xlu0 %1265
        %1267 = vrot.lane.b32.xlu0 %v1264, 64
        %v1268 = vpop.permute.xlu0 %1267
        %vm1269 = vcmask 523264
        %v1270 = vsel %vm1269, %v1266, %v1268
        %v1273 = vsel %vm588, %v1255, 0
        %v1276 = vsel %vm588, %v1256, 0
        %1278 = vmatpush.msra.mxu0 0.0
        %1279 = vmatpush.msra.mxu0 0.0
        %1280 = vmatpush.msra.mxu0 0.0
        %1281 = vmatpush.msra.mxu0 0.0
        %1282 = vmatpush.msra.mxu0 0.0
        %1283 = vmatpush.msra.mxu0 0.0
        %1284 = vmatpush.msra.mxu0 0.0
        %1285 = vmatpush.msra.mxu0 0.0
        %1286 = vmatpush.msra.mxu0 0.0
        %1287 = vmatpush.msra.mxu0 0.0
        %1288 = vmatpush.msra.mxu0 0.0
        %1289 = vmatpush.msra.mxu0 0.0
        %1290 = vmatpush.msra.mxu0 %v1260
        %1291 = vmatpush.msra.mxu0 %v1259
        %1292 = vmatpush.msra.mxu0 %v1258
        %1293 = vmatpush.msra.mxu0 %v1257
        %1294 = vmatmul.f32.gmra.mxu0 %v1273
        %v1295 = vpop.f32.mrf.mxu0
        %v1296 = vadd.f32 %v1270, %v1295
        %1297 = vmatmul.f32.gmra.mxu0 %v1276
        %v1298 = vpop.f32.mrf.mxu0
        %v1299 = vadd.f32 %v1270, %v1298
        %1300 = vdwg.mxu0
        %v1301 = vmax.f32 %v1296, 0.0
        %v1302 = vmax.f32 %v1299, 0.0
        %v1303 = vld [vmem:[%s487] sm:$0xff]
        %v1304 = vld [vmem:[%s487 + $0x8] sm:$0xff]
        %v1305 = vld [vmem:[%s487 + $0x10] sm:$0xff]
        %v1306 = vld [vmem:[%s487 + $0x18] sm:$0xff]
        %v1307 = vld [vmem:[%s487 + $0x20] sm:$0xff]
        %v1308 = vld [vmem:[%s487 + $0x28] sm:$0xff]
        %v1309 = vld [vmem:[%s487 + $0x30] sm:$0xff]
        %v1310 = vld [vmem:[%s487 + $0x38] sm:$0xff]
        %v1311 = vld [vmem:[%s487 + $0x40] sm:$0xff]
        %v1312 = vld [vmem:[%s487 + $0x48] sm:$0xff]
        %v1313 = vld [vmem:[%s487 + $0x50] sm:$0xff]
        %v1314 = vld [vmem:[%s487 + $0x58] sm:$0xff]
        %v1315 = vld [vmem:[%s487 + $0x60] sm:$0xff]
        %v1316 = vld [vmem:[%s487 + $0x68] sm:$0xff]
        %v1317 = vld [vmem:[%s487 + $0x70] sm:$0xff]
        %v1318 = vld [vmem:[%s487 + $0x78] sm:$0xff]
        %v1319 = vld [vmem:[%s491 + $0x2] sm:$0x1]
        %v1321 = vperm.slane %v1319, 0
        %1322 = vrot.lane.b32.xlu0 %v1321, 64
        %v1323 = vpop.permute.xlu0 %1322
        %1325 = vmatpush.msra.mxu0 %v1318
        %1326 = vmatpush.msra.mxu0 %v1317
        %1327 = vmatpush.msra.mxu0 %v1316
        %1328 = vmatpush.msra.mxu0 %v1315
        %1329 = vmatpush.msra.mxu0 %v1314
        %1330 = vmatpush.msra.mxu0 %v1313
        %1331 = vmatpush.msra.mxu0 %v1312
        %1332 = vmatpush.msra.mxu0 %v1311
        %1333 = vmatpush.msra.mxu0 %v1310
        %1334 = vmatpush.msra.mxu0 %v1309
        %1335 = vmatpush.msra.mxu0 %v1308
        %1336 = vmatpush.msra.mxu0 %v1307
        %1337 = vmatpush.msra.mxu0 %v1306
        %1338 = vmatpush.msra.mxu0 %v1305
        %1339 = vmatpush.msra.mxu0 %v1304
        %1340 = vmatpush.msra.mxu0 %v1303
        %1341 = vmatmul.f32.gmra.mxu0 %v1301
        %v1342 = vpop.f32.mrf.mxu0
        %v1343 = vadd.f32 %v1323, %v1342
        %1344 = vmatmul.f32.gmra.mxu0 %v1302
        %v1345 = vpop.f32.mrf.mxu0
        %v1346 = vadd.f32 %v1323, %v1345
        %1347 = vdwg.mxu0
        %v1348 = vadd.f32 %v1255, %v1343
        %v1349 = vadd.f32 %v1256, %v1346
        %v1350 = vld [vmem:[%s491 + $0x3] sm:$0x1]
        %v1351 = vsel %vm588, %v1348, 0.0
        %1352 = vadd.xlane.f32.xlu0 %v1351
        %v1353 = vpop.xlane.xlu0 %1352
        %v1354 = vsel %vm588, %v1349, 0.0
        %1355 = vadd.xlane.f32.xlu0 %v1354
        %v1356 = vpop.xlane.xlu0 %1355
        %v1357 = vmul.f32 %v1353, %v1208
        %v1358 = vmul.f32 %v1356, %v1208
        %v1359 = vsub.f32 %v1348, %v1357
        %v1360 = vsub.f32 %v1349, %v1358
        %v1361 = vmul.f32 %v1359, %v1359
        %v1362 = vmul.f32 %v1360, %v1360
        %v1363 = vsel %vm588, %v1361, 0.0
        %1364 = vadd.xlane.f32.xlu0 %v1363
        %v1365 = vpop.xlane.xlu0 %1364
        %v1366 = vsel %vm588, %v1362, 0.0
        %1367 = vadd.xlane.f32.xlu0 %v1366
        %v1368 = vpop.xlane.xlu0 %1367
        %v1369 = vmul.f32 %v1365, %v1208
        %v1370 = vmul.f32 %v1368, %v1208
        %v1371 = vadd.f32 %v1369, 1e-05
        %v1372 = vadd.f32 %v1370, 1e-05
        %v1373 = vrsqrt.pop %v1371
        %v1374 = vmul.f32 %v1373, %v1371
        %v1375 = vmul.f32 %v1374, %v1373
        %v1376 = vmul.f32 0.5, %v1375
        %v1377 = vsub.f32 1.5, %v1376
        %v1378 = vmul.f32 %v1373, %v1377
        %vm1379 = vweird.f32 %v1371
        %vm1380 = vweird.f32 %v1373
        %vm1381 = vmor %vm1379, %vm1380
        %v1382 = vsel %vm1381, %v1373, %v1378
        %v1383 = vrsqrt.pop %v1372
        %v1384 = vmul.f32 %v1383, %v1372
        %v1385 = vmul.f32 %v1384, %v1383
        %v1386 = vmul.f32 0.5, %v1385
        %v1387 = vsub.f32 1.5, %v1386
        %v1388 = vmul.f32 %v1383, %v1387
        %vm1389 = vweird.f32 %v1372
        %vm1390 = vweird.f32 %v1383
        %vm1391 = vmor %vm1389, %vm1390
        %v1392 = vsel %vm1391, %v1383, %v1388
        %v1393 = vmul.f32 %v1359, %v1382
        %v1394 = vmul.f32 %v1360, %v1392
        %1395 = vrot.lane.b32.xlu0 %v1321, 32
        %v1396 = vpop.permute.xlu0 %1395
        %v1398 = vmul.f32 %v1393, %v1396
        %v1399 = vmul.f32 %v1394, %v1396
        %v1401 = vperm.slane %v1350, 0
        %v1403 = vadd.f32 %v1398, %v1401
        %v1404 = vadd.f32 %v1399, %v1401
        %1405 = vst.msk [vmem:[#allocation2] sm:$0xff] %vm588, %v1403
        %1406 = vst.msk [vmem:[#allocation2 + $0x8] sm:$0xff] %vm588, %v1404
        %v1407 = vld [vmem:[%s495] sm:$0xff]
        %v1408 = vld [vmem:[%s482 + $0x10] sm:$0xff]
        %v1409 = vld [vmem:[%s482 + $0x28] sm:$0xff]
        %v1410 = vld [vmem:[%s482 + $0x40] sm:$0xff]
        %v1411 = vld [vmem:[%s482 + $0x58] sm:$0xff]
        %v1412 = vld [vmem:[%s491 + $0x3] sm:$0x1]
        %v1413 = vld [vmem:[%s491 + $0x4] sm:$0x1]
        %v1415 = vperm.slane %v1412, 0
        %1416 = vrot.lane.b32.xlu0 %v1415, 96
        %v1417 = vpop.permute.xlu0 %1416
        %v1420 = vsel %vm588, %v1407, 0
        %1422 = vmatpush.msra.mxu0 0.0
        %1423 = vmatpush.msra.mxu0 0.0
        %1424 = vmatpush.msra.mxu0 0.0
        %1425 = vmatpush.msra.mxu0 0.0
        %1426 = vmatpush.msra.mxu0 0.0
        %1427 = vmatpush.msra.mxu0 0.0
        %1428 = vmatpush.msra.mxu0 0.0
        %1429 = vmatpush.msra.mxu0 0.0
        %1430 = vmatpush.msra.mxu0 0.0
        %1431 = vmatpush.msra.mxu0 0.0
        %1432 = vmatpush.msra.mxu0 0.0
        %1433 = vmatpush.msra.mxu0 0.0
        %1434 = vmatpush.msra.mxu0 %v1411
        %1435 = vmatpush.msra.mxu0 %v1410
        %1436 = vmatpush.msra.mxu0 %v1409
        %1437 = vmatpush.msra.mxu0 %v1408
        %1438 = vmatmul.f32.gmra.mxu0 %v1420
        %v1439 = vpop.f32.mrf.mxu0
        %v1440 = vadd.f32 %v1417, %v1439
        %1441 = vdwg.mxu0
        %1446 = vrot.lane.b32.xlu0 %v1408, 96
        %v1447 = vpop.permute.xlu0 %1446
        %1448 = vrot.lane.b32.xlu0 %v1409, 96
        %v1449 = vpop.permute.xlu0 %1448
        %1450 = vrot.lane.b32.xlu0 %v1410, 96
        %v1451 = vpop.permute.xlu0 %1450
        %1452 = vrot.lane.b32.xlu0 %v1411, 96
        %v1453 = vpop.permute.xlu0 %1452
        %1458 = vrot.lane.b32.xlu0 %v1415, 64
        %v1459 = vpop.permute.xlu0 %1458
        %v1462 = vsel %vm588, %v1403, 0
        %v1465 = vsel %vm588, %v1404, 0
        %1467 = vmatpush.msra.mxu0 0.0
        %1468 = vmatpush.msra.mxu0 0.0
        %1469 = vmatpush.msra.mxu0 0.0
        %1470 = vmatpush.msra.mxu0 0.0
        %1471 = vmatpush.msra.mxu0 0.0
        %1472 = vmatpush.msra.mxu0 0.0
        %1473 = vmatpush.msra.mxu0 0.0
        %1474 = vmatpush.msra.mxu0 0.0
        %1475 = vmatpush.msra.mxu0 0.0
        %1476 = vmatpush.msra.mxu0 0.0
        %1477 = vmatpush.msra.mxu0 0.0
        %1478 = vmatpush.msra.mxu0 0.0
        %1479 = vmatpush.msra.mxu0 %v1453
        %1480 = vmatpush.msra.mxu0 %v1451
        %1481 = vmatpush.msra.mxu0 %v1449
        %1482 = vmatpush.msra.mxu0 %v1447
        %1483 = vmatmul.f32.gmra.mxu0 %v1462
        %v1484 = vpop.f32.mrf.mxu0
        %v1485 = vadd.f32 %v1459, %v1484
        %1486 = vmatmul.f32.gmra.mxu0 %v1465
        %v1487 = vpop.f32.mrf.mxu0
        %v1488 = vadd.f32 %v1459, %v1487
        %1489 = vdwg.mxu0
        %v1491 = vsel %vm624, %v1440, 0
        %v1494 = vsel %vm624, %v1485, 0
        %v1497 = vsel %vm624, %v1488, 0
        %1499 = vmatpush.xpose.msra.mxu0 0.0
        %1500 = vmatpush.xpose.msra.mxu0 0.0
        %1501 = vmatpush.xpose.msra.mxu0 0.0
        %1502 = vmatpush.xpose.msra.mxu0 0.0
        %1503 = vmatpush.xpose.msra.mxu0 0.0
        %1504 = vmatpush.xpose.msra.mxu0 0.0
        %1505 = vmatpush.xpose.msra.mxu0 0.0
        %1506 = vmatpush.xpose.msra.mxu0 0.0
        %1507 = vmatpush.xpose.msra.mxu0 0.0
        %1508 = vmatpush.xpose.msra.mxu0 0.0
        %1509 = vmatpush.xpose.msra.mxu0 0.0
        %1510 = vmatpush.xpose.msra.mxu0 0.0
        %1511 = vmatpush.xpose.msra.mxu0 0.0
        %1512 = vmatpush.xpose.msra.mxu0 0.0
        %1513 = vmatpush.xpose.msra.mxu0 %v1497
        %1514 = vmatpush.xpose.msra.mxu0 %v1494
        %1515 = vmatmul.f32.gmra.mxu0 %v1491
        %v1516 = vpop.f32.mrf.mxu0
        %v1517 = vadd.f32 0.0, %v1516
        %1518 = vdwg.mxu0
        %v1519 = vmul.f32 %v1517, 0.35355338
        %v1520 = vsel %vm658, %v1519, -inf
        %1521 = vmax.xlane.f32.xlu0 %v1520
        %v1522 = vpop.xlane.xlu0 %1521
        %v1523 = vsub.f32 %v1519, %v1522
        %v1524 = vmul.f32 %v1523, 1.442695
        %v1525 = vpow.pop %v1524
        %v1526 = vsel %vm658, %v1525, 0.0
        %1527 = vadd.xlane.f32.xlu0 %v1526
        %v1528 = vpop.xlane.xlu0 %1527
        %v1529 = vrcp.pop %v1528
        %v1530 = vmul.f32 %v1528, %v1529
        %v1531 = vsub.f32 1.0, %v1530
        %v1532 = vmul.f32 %v1529, %v1531
        %v1533 = vadd.f32 %v1529, %v1532
        %vm1534 = vweird.f32 %v1528
        %vm1535 = vweird.f32 %v1529
        %vm1536 = vmor %vm1534, %vm1535
        %v1537 = vsel %vm1536, %v1529, %v1533
        %v1538 = vand.u32 2147483647, %v1528
        %vm1539 = vcmp.eq.f32.partialorder %v1538, 8.507059e+37
        %v1540 = vand.u32 %v1528, 2147483648
        %v1541 = vor.u32 1.1754944e-38, %v1540
        %v1542 = vsel %vm1539, %v1541, %v1537
        %v1543 = vmul.f32 %v1525, %v1542
        %1544 = vrot.lane.b32.xlu0 %v1485, 96
        %v1545 = vpop.permute.xlu0 %1544
        %1546 = vrot.lane.b32.xlu0 %v1488, 96
        %v1547 = vpop.permute.xlu0 %1546
        %v1551 = vsel %vm658, %v1543, 0
        %1553 = vmatpush.msra.mxu0 0.0
        %1554 = vmatpush.msra.mxu0 0.0
        %1555 = vmatpush.msra.mxu0 0.0
        %1556 = vmatpush.msra.mxu0 0.0
        %1557 = vmatpush.msra.mxu0 0.0
        %1558 = vmatpush.msra.mxu0 0.0
        %1559 = vmatpush.msra.mxu0 0.0
        %1560 = vmatpush.msra.mxu0 0.0
        %1561 = vmatpush.msra.mxu0 0.0
        %1562 = vmatpush.msra.mxu0 0.0
        %1563 = vmatpush.msra.mxu0 0.0
        %1564 = vmatpush.msra.mxu0 0.0
        %1565 = vmatpush.msra.mxu0 0.0
        %1566 = vmatpush.msra.mxu0 0.0
        %1567 = vmatpush.msra.mxu0 %v1547
        %1568 = vmatpush.msra.mxu0 %v1545
        %1569 = vmatmul.f32.gmra.mxu0 %v1551
        %v1570 = vpop.f32.mrf.mxu0
        %v1571 = vadd.f32 0.0, %v1570
        %1572 = vdwg.mxu0
        %1573 = vrot.lane.b32.xlu0 %v1440, 120
        %v1574 = vpop.permute.xlu0 %1573
        %1575 = vrot.lane.b32.xlu0 %v1485, 120
        %v1576 = vpop.permute.xlu0 %1575
        %1577 = vrot.lane.b32.xlu0 %v1488, 120
        %v1578 = vpop.permute.xlu0 %1577
        %v1579 = vsel %vm624, %v1574, 0
        %v1581 = vsel %vm624, %v1576, 0
        %v1583 = vsel %vm624, %v1578, 0
        %1585 = vmatpush.xpose.msra.mxu0 0.0
        %1586 = vmatpush.xpose.msra.mxu0 0.0
        %1587 = vmatpush.xpose.msra.mxu0 0.0
        %1588 = vmatpush.xpose.msra.mxu0 0.0
        %1589 = vmatpush.xpose.msra.mxu0 0.0
        %1590 = vmatpush.xpose.msra.mxu0 0.0
        %1591 = vmatpush.xpose.msra.mxu0 0.0
        %1592 = vmatpush.xpose.msra.mxu0 0.0
        %1593 = vmatpush.xpose.msra.mxu0 0.0
        %1594 = vmatpush.xpose.msra.mxu0 0.0
        %1595 = vmatpush.xpose.msra.mxu0 0.0
        %1596 = vmatpush.xpose.msra.mxu0 0.0
        %1597 = vmatpush.xpose.msra.mxu0 0.0
        %1598 = vmatpush.xpose.msra.mxu0 0.0
        %1599 = vmatpush.xpose.msra.mxu0 %v1583
        %1600 = vmatpush.xpose.msra.mxu0 %v1581
        %1601 = vmatmul.f32.gmra.mxu0 %v1579
        %v1602 = vpop.f32.mrf.mxu0
        %v1603 = vadd.f32 0.0, %v1602
        %1604 = vdwg.mxu0
        %v1605 = vmul.f32 %v1603, 0.35355338
        %v1606 = vsel %vm658, %v1605, -inf
        %1607 = vmax.xlane.f32.xlu0 %v1606
        %v1608 = vpop.xlane.xlu0 %1607
        %v1609 = vsub.f32 %v1605, %v1608
        %v1610 = vmul.f32 %v1609, 1.442695
        %v1611 = vpow.pop %v1610
        %v1612 = vsel %vm658, %v1611, 0.0
        %1613 = vadd.xlane.f32.xlu0 %v1612
        %v1614 = vpop.xlane.xlu0 %1613
        %v1615 = vrcp.pop %v1614
        %v1616 = vmul.f32 %v1614, %v1615
        %v1617 = vsub.f32 1.0, %v1616
        %v1618 = vmul.f32 %v1615, %v1617
        %v1619 = vadd.f32 %v1615, %v1618
        %vm1620 = vweird.f32 %v1614
        %vm1621 = vweird.f32 %v1615
        %vm1622 = vmor %vm1620, %vm1621
        %v1623 = vsel %vm1622, %v1615, %v1619
        %v1624 = vand.u32 2147483647, %v1614
        %vm1625 = vcmp.eq.f32.partialorder %v1624, 8.507059e+37
        %v1626 = vand.u32 %v1614, 2147483648
        %v1627 = vor.u32 1.1754944e-38, %v1626
        %v1628 = vsel %vm1625, %v1627, %v1623
        %v1629 = vmul.f32 %v1611, %v1628
        %1630 = vrot.lane.b32.xlu0 %v1485, 88
        %v1631 = vpop.permute.xlu0 %1630
        %1632 = vrot.lane.b32.xlu0 %v1488, 88
        %v1633 = vpop.permute.xlu0 %1632
        %v1637 = vsel %vm658, %v1629, 0
        %1639 = vmatpush.msra.mxu0 0.0
        %1640 = vmatpush.msra.mxu0 0.0
        %1641 = vmatpush.msra.mxu0 0.0
        %1642 = vmatpush.msra.mxu0 0.0
        %1643 = vmatpush.msra.mxu0 0.0
        %1644 = vmatpush.msra.mxu0 0.0
        %1645 = vmatpush.msra.mxu0 0.0
        %1646 = vmatpush.msra.mxu0 0.0
        %1647 = vmatpush.msra.mxu0 0.0
        %1648 = vmatpush.msra.mxu0 0.0
        %1649 = vmatpush.msra.mxu0 0.0
        %1650 = vmatpush.msra.mxu0 0.0
        %1651 = vmatpush.msra.mxu0 0.0
        %1652 = vmatpush.msra.mxu0 0.0
        %1653 = vmatpush.msra.mxu0 %v1633
        %1654 = vmatpush.msra.mxu0 %v1631
        %1655 = vmatmul.f32.gmra.mxu0 %v1637
        %v1656 = vpop.f32.mrf.mxu0
        %v1657 = vadd.f32 0.0, %v1656
        %1658 = vdwg.mxu0
        %v1659 = vadd.f32 %v1543, %v1629
        %1660 = vrot.lane.b32.xlu0 %v1440, 112
        %v1661 = vpop.permute.xlu0 %1660
        %1662 = vrot.lane.b32.xlu0 %v1485, 112
        %v1663 = vpop.permute.xlu0 %1662
        %1664 = vrot.lane.b32.xlu0 %v1488, 112
        %v1665 = vpop.permute.xlu0 %1664
        %v1666 = vsel %vm624, %v1661, 0
        %v1668 = vsel %vm624, %v1663, 0
        %v1670 = vsel %vm624, %v1665, 0
        %1672 = vmatpush.xpose.msra.mxu0 0.0
        %1673 = vmatpush.xpose.msra.mxu0 0.0
        %1674 = vmatpush.xpose.msra.mxu0 0.0
        %1675 = vmatpush.xpose.msra.mxu0 0.0
        %1676 = vmatpush.xpose.msra.mxu0 0.0
        %1677 = vmatpush.xpose.msra.mxu0 0.0
        %1678 = vmatpush.xpose.msra.mxu0 0.0
        %1679 = vmatpush.xpose.msra.mxu0 0.0
        %1680 = vmatpush.xpose.msra.mxu0 0.0
        %1681 = vmatpush.xpose.msra.mxu0 0.0
        %1682 = vmatpush.xpose.msra.mxu0 0.0
        %1683 = vmatpush.xpose.msra.mxu0 0.0
        %1684 = vmatpush.xpose.msra.mxu0 0.0
        %1685 = vmatpush.xpose.msra.mxu0 0.0
        %1686 = vmatpush.xpose.msra.mxu0 %v1670
        %1687 = vmatpush.xpose.msra.mxu0 %v1668
        %1688 = vmatmul.f32.gmra.mxu0 %v1666
        %v1689 = vpop.f32.mrf.mxu0
        %v1690 = vadd.f32 0.0, %v1689
        %1691 = vdwg.mxu0
        %v1692 = vmul.f32 %v1690, 0.35355338
        %v1693 = vsel %vm658, %v1692, -inf
        %1694 = vmax.xlane.f32.xlu0 %v1693
        %v1695 = vpop.xlane.xlu0 %1694
        %v1696 = vsub.f32 %v1692, %v1695
        %v1697 = vmul.f32 %v1696, 1.442695
        %v1698 = vpow.pop %v1697
        %v1699 = vsel %vm658, %v1698, 0.0
        %1700 = vadd.xlane.f32.xlu0 %v1699
        %v1701 = vpop.xlane.xlu0 %1700
        %v1702 = vrcp.pop %v1701
        %v1703 = vmul.f32 %v1701, %v1702
        %v1704 = vsub.f32 1.0, %v1703
        %v1705 = vmul.f32 %v1702, %v1704
        %v1706 = vadd.f32 %v1702, %v1705
        %vm1707 = vweird.f32 %v1701
        %vm1708 = vweird.f32 %v1702
        %vm1709 = vmor %vm1707, %vm1708
        %v1710 = vsel %vm1709, %v1702, %v1706
        %v1711 = vand.u32 2147483647, %v1701
        %vm1712 = vcmp.eq.f32.partialorder %v1711, 8.507059e+37
        %v1713 = vand.u32 %v1701, 2147483648
        %v1714 = vor.u32 1.1754944e-38, %v1713
        %v1715 = vsel %vm1712, %v1714, %v1710
        %v1716 = vmul.f32 %v1698, %v1715
        %1717 = vrot.lane.b32.xlu0 %v1485, 80
        %v1718 = vpop.permute.xlu0 %1717
        %1719 = vrot.lane.b32.xlu0 %v1488, 80
        %v1720 = vpop.permute.xlu0 %1719
        %v1724 = vsel %vm658, %v1716, 0
        %1726 = vmatpush.msra.mxu0 0.0
        %1727 = vmatpush.msra.mxu0 0.0
        %1728 = vmatpush.msra.mxu0 0.0
        %1729 = vmatpush.msra.mxu0 0.0
        %1730 = vmatpush.msra.mxu0 0.0
        %1731 = vmatpush.msra.mxu0 0.0
        %1732 = vmatpush.msra.mxu0 0.0
        %1733 = vmatpush.msra.mxu0 0.0
        %1734 = vmatpush.msra.mxu0 0.0
        %1735 = vmatpush.msra.mxu0 0.0
        %1736 = vmatpush.msra.mxu0 0.0
        %1737 = vmatpush.msra.mxu0 0.0
        %1738 = vmatpush.msra.mxu0 0.0
        %1739 = vmatpush.msra.mxu0 0.0
        %1740 = vmatpush.msra.mxu0 %v1720
        %1741 = vmatpush.msra.mxu0 %v1718
        %1742 = vmatmul.f32.gmra.mxu0 %v1724
        %v1743 = vpop.f32.mrf.mxu0
        %v1744 = vadd.f32 0.0, %v1743
        %1745 = vdwg.mxu0
        %v1746 = vadd.f32 %v1659, %v1716
        %1747 = vrot.lane.b32.xlu0 %v1440, 104
        %v1748 = vpop.permute.xlu0 %1747
        %1749 = vrot.lane.b32.xlu0 %v1485, 104
        %v1750 = vpop.permute.xlu0 %1749
        %1751 = vrot.lane.b32.xlu0 %v1488, 104
        %v1752 = vpop.permute.xlu0 %1751
        %v1753 = vsel %vm624, %v1748, 0
        %v1755 = vsel %vm624, %v1750, 0
        %v1757 = vsel %vm624, %v1752, 0
        %1759 = vmatpush.xpose.msra.mxu0 0.0
        %1760 = vmatpush.xpose.msra.mxu0 0.0
        %1761 = vmatpush.xpose.msra.mxu0 0.0
        %1762 = vmatpush.xpose.msra.mxu0 0.0
        %1763 = vmatpush.xpose.msra.mxu0 0.0
        %1764 = vmatpush.xpose.msra.mxu0 0.0
        %1765 = vmatpush.xpose.msra.mxu0 0.0
        %1766 = vmatpush.xpose.msra.mxu0 0.0
        %1767 = vmatpush.xpose.msra.mxu0 0.0
        %1768 = vmatpush.xpose.msra.mxu0 0.0
        %1769 = vmatpush.xpose.msra.mxu0 0.0
        %1770 = vmatpush.xpose.msra.mxu0 0.0
        %1771 = vmatpush.xpose.msra.mxu0 0.0
        %1772 = vmatpush.xpose.msra.mxu0 0.0
        %1773 = vmatpush.xpose.msra.mxu0 %v1757
        %1774 = vmatpush.xpose.msra.mxu0 %v1755
        %1775 = vmatmul.f32.gmra.mxu0 %v1753
        %v1776 = vpop.f32.mrf.mxu0
        %v1777 = vadd.f32 0.0, %v1776
        %1778 = vdwg.mxu0
        %v1779 = vmul.f32 %v1777, 0.35355338
        %v1780 = vsel %vm658, %v1779, -inf
        %1781 = vmax.xlane.f32.xlu0 %v1780
        %v1782 = vpop.xlane.xlu0 %1781
        %v1783 = vsub.f32 %v1779, %v1782
        %v1784 = vmul.f32 %v1783, 1.442695
        %v1785 = vpow.pop %v1784
        %v1786 = vsel %vm658, %v1785, 0.0
        %1787 = vadd.xlane.f32.xlu0 %v1786
        %v1788 = vpop.xlane.xlu0 %1787
        %v1789 = vrcp.pop %v1788
        %v1790 = vmul.f32 %v1788, %v1789
        %v1791 = vsub.f32 1.0, %v1790
        %v1792 = vmul.f32 %v1789, %v1791
        %v1793 = vadd.f32 %v1789, %v1792
        %vm1794 = vweird.f32 %v1788
        %vm1795 = vweird.f32 %v1789
        %vm1796 = vmor %vm1794, %vm1795
        %v1797 = vsel %vm1796, %v1789, %v1793
        %v1798 = vand.u32 2147483647, %v1788
        %vm1799 = vcmp.eq.f32.partialorder %v1798, 8.507059e+37
        %v1800 = vand.u32 %v1788, 2147483648
        %v1801 = vor.u32 1.1754944e-38, %v1800
        %v1802 = vsel %vm1799, %v1801, %v1797
        %v1803 = vmul.f32 %v1785, %v1802
        %1804 = vrot.lane.b32.xlu0 %v1485, 72
        %v1805 = vpop.permute.xlu0 %1804
        %1806 = vrot.lane.b32.xlu0 %v1488, 72
        %v1807 = vpop.permute.xlu0 %1806
        %v1811 = vsel %vm658, %v1803, 0
        %1813 = vmatpush.msra.mxu0 0.0
        %1814 = vmatpush.msra.mxu0 0.0
        %1815 = vmatpush.msra.mxu0 0.0
        %1816 = vmatpush.msra.mxu0 0.0
        %1817 = vmatpush.msra.mxu0 0.0
        %1818 = vmatpush.msra.mxu0 0.0
        %1819 = vmatpush.msra.mxu0 0.0
        %1820 = vmatpush.msra.mxu0 0.0
        %1821 = vmatpush.msra.mxu0 0.0
        %1822 = vmatpush.msra.mxu0 0.0
        %1823 = vmatpush.msra.mxu0 0.0
        %1824 = vmatpush.msra.mxu0 0.0
        %1825 = vmatpush.msra.mxu0 0.0
        %1826 = vmatpush.msra.mxu0 0.0
        %1827 = vmatpush.msra.mxu0 %v1807
        %1828 = vmatpush.msra.mxu0 %v1805
        %1829 = vmatmul.f32.gmra.mxu0 %v1811
        %v1830 = vpop.f32.mrf.mxu0
        %v1831 = vadd.f32 0.0, %v1830
        %1832 = vdwg.mxu0
        %v1833 = vadd.f32 %v1746, %v1803
        %1835 = vrot.lane.b32.xlu0 %v1657, 8
        %v1836 = vpop.permute.xlu0 %1835
        %1839 = vrot.lane.b32.xlu0 %v1744, 16
        %v1840 = vpop.permute.xlu0 %1839
        %1843 = vrot.lane.b32.xlu0 %v1831, 24
        %v1844 = vpop.permute.xlu0 %1843
        %v1846 = vsel %vm624, %v1571, %v1836
        %v1847 = vsel %vm658, %v1846, %v1840
        %v1848 = vsel %vm1142, %v1847, %v1844
        %v1850 = vperm.slane %v1413, 0
        %1852 = vrot.lane.b32.xlu0 %v1408, 32
        %v1853 = vpop.permute.xlu0 %1852
        %1854 = vrot.lane.b32.xlu0 %v1409, 32
        %v1855 = vpop.permute.xlu0 %1854
        %1856 = vrot.lane.b32.xlu0 %v1410, 32
        %v1857 = vpop.permute.xlu0 %1856
        %1858 = vrot.lane.b32.xlu0 %v1411, 32
        %v1859 = vpop.permute.xlu0 %1858
        %v1865 = vsel %vm588, %v1848, 0
        %1867 = vmatpush.msra.mxu0 0.0
        %1868 = vmatpush.msra.mxu0 0.0
        %1869 = vmatpush.msra.mxu0 0.0
        %1870 = vmatpush.msra.mxu0 0.0
        %1871 = vmatpush.msra.mxu0 0.0
        %1872 = vmatpush.msra.mxu0 0.0
        %1873 = vmatpush.msra.mxu0 0.0
        %1874 = vmatpush.msra.mxu0 0.0
        %1875 = vmatpush.msra.mxu0 0.0
        %1876 = vmatpush.msra.mxu0 0.0
        %1877 = vmatpush.msra.mxu0 0.0
        %1878 = vmatpush.msra.mxu0 0.0
        %1879 = vmatpush.msra.mxu0 %v1859
        %1880 = vmatpush.msra.mxu0 %v1857
        %1881 = vmatpush.msra.mxu0 %v1855
        %1882 = vmatpush.msra.mxu0 %v1853
        %1883 = vmatmul.f32.gmra.mxu0 %v1865
        %v1884 = vpop.f32.mrf.mxu0
        %v1885 = vadd.f32 %v1850, %v1884
        %1886 = vdwg.mxu0
        %v1887 = vmul.f32 %v1833, 0.25
        %v1888 = vsel %vm588, %v1885, 0.0
        %1889 = vadd.xlane.f32.xlu0 %v1888
        %v1890 = vpop.xlane.xlu0 %1889
        %v1891 = vmul.f32 %v1890, %v1208
        %v1892 = vsub.f32 %v1885, %v1891
        %v1893 = vmul.f32 %v1892, %v1892
        %v1894 = vsel %vm588, %v1893, 0.0
        %1895 = vadd.xlane.f32.xlu0 %v1894
        %v1896 = vpop.xlane.xlu0 %1895
        %v1897 = vmul.f32 %v1896, %v1208
        %v1898 = vadd.f32 %v1897, 1e-05
        %v1899 = vrsqrt.pop %v1898
        %v1900 = vmul.f32 %v1899, %v1898
        %v1901 = vmul.f32 %v1900, %v1899
        %v1902 = vmul.f32 0.5, %v1901
        %v1903 = vsub.f32 1.5, %v1902
        %v1904 = vmul.f32 %v1899, %v1903
        %vm1905 = vweird.f32 %v1898
        %vm1906 = vweird.f32 %v1899
        %vm1907 = vmor %vm1905, %vm1906
        %v1908 = vsel %vm1907, %v1899, %v1904
        %v1909 = vmul.f32 %v1892, %v1908
        %1910 = vrot.lane.b32.xlu0 %v1850, 96
        %v1911 = vpop.permute.xlu0 %1910
        %v1913 = vmul.f32 %v1909, %v1911
        %1914 = vrot.lane.b32.xlu0 %v1850, 64
        %v1915 = vpop.permute.xlu0 %1914
        %v1917 = vadd.f32 %v1913, %v1915
        %1918 = vst.msk [vmem:[%s507] sm:$0xff] %vm658, %v1887
        %v1919 = vld [vmem:[#allocation3] sm:$0xf]
        %v1920 = vld [vmem:[%s499] sm:$0xf]
        %v1922 = vsel %vm624, %v1920, 0
        %1924 = vmatpush.msra.mxu0 0.0
        %1925 = vmatpush.msra.mxu0 0.0
        %1926 = vmatpush.msra.mxu0 0.0
        %1927 = vmatpush.msra.mxu0 0.0
        %1928 = vmatpush.msra.mxu0 0.0
        %1929 = vmatpush.msra.mxu0 0.0
        %1930 = vmatpush.msra.mxu0 0.0
        %1931 = vmatpush.msra.mxu0 0.0
        %1932 = vmatpush.msra.mxu0 0.0
        %1933 = vmatpush.msra.mxu0 0.0
        %1934 = vmatpush.msra.mxu0 0.0
        %1935 = vmatpush.msra.mxu0 0.0
        %1936 = vmatpush.msra.mxu0 0.0
        %1937 = vmatpush.msra.mxu0 0.0
        %1938 = vmatpush.msra.mxu0 0.0
        %1939 = vmatpush.msra.mxu0 %v1917
        %1940 = vmatmul.f32.gmra.mxu0 %v1922
        %v1941 = vpop.f32.mrf.mxu0
        %v1942 = vadd.f32 0.0, %v1941
        %1943 = vdwg.mxu0
        %v1944 = vadd.f32 %v1919, %v1942
        %vm1945 = vcmask 257024
        %1946 = vst.msk [vmem:[#allocation3] sm:$0xf] %vm1945, %v1944
        %p1947 = scmp.eq.s32.totalorder %s31, 1
        // Predicated region
        $region65: #{boq_forward.1} parent=59 // pred_check
          %p1948 = pneg %p1947
        $region66: #{boq_forward.1} parent=59 // pred_check_branch
          %1950 = sbr.rel (%p1948) target = $region68
        $region67: #{boq_forward.1} parent=59 // pred_region
          %v1951 = vld [vmem:[#allocation3] sm:$0xf]
          %v1952 = vld [vmem:[%s7] sm:$0xf]
          %1954 = vset.pattern.permute.xlu0 0
          %1955 = vperm.xlu0 %1954, %v1952
          %v1956 = vpop.permute.xlu0 %1955
          %v1958 = vadd.f32 %v1951, %v1956
          %v1959 = vld [vmem:[%s9] sm:$0x1]
          %v1960 = vld [vmem:[%s8] sm:$0xff]
          %v1961 = vld [vmem:[%s8 + $0x8] sm:$0xff]
          %v1962 = vld [vmem:[%s8 + $0x10] sm:$0xff]
          %v1963 = vld [vmem:[%s8 + $0x18] sm:$0xff]
          %v1965 = vsel %vm588, %v1958, 0
          %1967 = vmatpush.msra.mxu0 0.0
          %1968 = vmatpush.msra.mxu0 0.0
          %1969 = vmatpush.msra.mxu0 0.0
          %1970 = vmatpush.msra.mxu0 0.0
          %1971 = vmatpush.msra.mxu0 0.0
          %1972 = vmatpush.msra.mxu0 0.0
          %1973 = vmatpush.msra.mxu0 0.0
          %1974 = vmatpush.msra.mxu0 0.0
          %1975 = vmatpush.msra.mxu0 0.0
          %1976 = vmatpush.msra.mxu0 0.0
          %1977 = vmatpush.msra.mxu0 0.0
          %1978 = vmatpush.msra.mxu0 0.0
          %1979 = vmatpush.msra.mxu0 %v1963
          %1980 = vmatpush.msra.mxu0 %v1962
          %1981 = vmatpush.msra.mxu0 %v1961
          %1982 = vmatpush.msra.mxu0 %v1960
          %1983 = vmatmul.f32.gmra.mxu0 %v1965
          %v1984 = vpop.f32.mrf.mxu0
          %v1985 = vadd.f32 0.0, %v1984
          %1986 = vdwg.mxu0
          %v1987 = vadd.f32 %v1959, %v1985
          %s1988 = scalar_lea.vmem %s8, 32
          %v1989 = vld [vmem:[%s1988] sm:$0xff]
          %v1990 = vld [vmem:[%s1988 + $0x8] sm:$0xff]
          %v1991 = vld [vmem:[%s1988 + $0x10] sm:$0xff]
          %v1992 = vld [vmem:[%s1988 + $0x18] sm:$0xff]
          %v1993 = vrot.slane %v1958, 1
          %v1994 = vsel %vm588, %v1993, 0
          %1996 = vmatpush.msra.mxu0 0.0
          %1997 = vmatpush.msra.mxu0 0.0
          %1998 = vmatpush.msra.mxu0 0.0
          %1999 = vmatpush.msra.mxu0 0.0
          %2000 = vmatpush.msra.mxu0 0.0
          %2001 = vmatpush.msra.mxu0 0.0
          %2002 = vmatpush.msra.mxu0 0.0
          %2003 = vmatpush.msra.mxu0 0.0
          %2004 = vmatpush.msra.mxu0 0.0
          %2005 = vmatpush.msra.mxu0 0.0
          %2006 = vmatpush.msra.mxu0 0.0
          %2007 = vmatpush.msra.mxu0 0.0
          %2008 = vmatpush.msra.mxu0 %v1992
          %2009 = vmatpush.msra.mxu0 %v1991
          %2010 = vmatpush.msra.mxu0 %v1990
          %2011 = vmatpush.msra.mxu0 %v1989
          %2012 = vmatmul.f32.gmra.mxu0 %v1994
          %v2013 = vpop.f32.mrf.mxu0
          %v2014 = vadd.f32 0.0, %v2013
          %2015 = vdwg.mxu0
          %v2016 = vadd.f32 %v1987, %v2014
          %s2017 = scalar_lea.vmem %s8, 64
          %v2018 = vld [vmem:[%s2017] sm:$0xff]
          %v2019 = vld [vmem:[%s2017 + $0x8] sm:$0xff]
          %v2020 = vld [vmem:[%s2017 + $0x10] sm:$0xff]
          %v2021 = vld [vmem:[%s2017 + $0x18] sm:$0xff]
          %v2022 = vrot.slane %v1958, 2
          %v2023 = vsel %vm588, %v2022, 0
          %2025 = vmatpush.msra.mxu0 0.0
          %2026 = vmatpush.msra.mxu0 0.0
          %2027 = vmatpush.msra.mxu0 0.0
          %2028 = vmatpush.msra.mxu0 0.0
          %2029 = vmatpush.msra.mxu0 0.0
          %2030 = vmatpush.msra.mxu0 0.0
          %2031 = vmatpush.msra.mxu0 0.0
          %2032 = vmatpush.msra.mxu0 0.0
          %2033 = vmatpush.msra.mxu0 0.0
          %2034 = vmatpush.msra.mxu0 0.0
          %2035 = vmatpush.msra.mxu0 0.0
          %2036 = vmatpush.msra.mxu0 0.0
          %2037 = vmatpush.msra.mxu0 %v2021
          %2038 = vmatpush.msra.mxu0 %v2020
          %2039 = vmatpush.msra.mxu0 %v2019
          %2040 = vmatpush.msra.mxu0 %v2018
          %2041 = vmatmul.f32.gmra.mxu0 %v2023
          %v2042 = vpop.f32.mrf.mxu0
          %v2043 = vadd.f32 0.0, %v2042
          %2044 = vdwg.mxu0
          %v2045 = vadd.f32 %v2016, %v2043
          %s2046 = scalar_lea.vmem %s8, 96
          %v2047 = vld [vmem:[%s2046] sm:$0xff]
          %v2048 = vld [vmem:[%s2046 + $0x8] sm:$0xff]
          %v2049 = vld [vmem:[%s2046 + $0x10] sm:$0xff]
          %v2050 = vld [vmem:[%s2046 + $0x18] sm:$0xff]
          %v2051 = vrot.slane %v1958, 3
          %v2052 = vsel %vm588, %v2051, 0
          %2054 = vmatpush.msra.mxu0 0.0
          %2055 = vmatpush.msra.mxu0 0.0
          %2056 = vmatpush.msra.mxu0 0.0
          %2057 = vmatpush.msra.mxu0 0.0
          %2058 = vmatpush.msra.mxu0 0.0
          %2059 = vmatpush.msra.mxu0 0.0
          %2060 = vmatpush.msra.mxu0 0.0
          %2061 = vmatpush.msra.mxu0 0.0
          %2062 = vmatpush.msra.mxu0 0.0
          %2063 = vmatpush.msra.mxu0 0.0
          %2064 = vmatpush.msra.mxu0 0.0
          %2065 = vmatpush.msra.mxu0 0.0
          %2066 = vmatpush.msra.mxu0 %v2050
          %2067 = vmatpush.msra.mxu0 %v2049
          %2068 = vmatpush.msra.mxu0 %v2048
          %2069 = vmatpush.msra.mxu0 %v2047
          %2070 = vmatmul.f32.gmra.mxu0 %v2052
          %v2071 = vpop.f32.mrf.mxu0
          %v2072 = vadd.f32 0.0, %v2071
          %2073 = vdwg.mxu0
          %v2074 = vadd.f32 %v2045, %v2072
          %v2075 = vmul.f32 %v2074, %v2074
          %vm2076 = vcmask 253952
          %v2077 = vsel %vm2076, %v2075, 0.0
          %2078 = vadd.xlane.f32.xlu0 %v2077
          %v2079 = vpop.xlane.xlu0 %2078
          %v2080 = vmax.f32 %v2079, 1e-24
          %v2081 = vrsqrt.pop %v2080
          %v2082 = vmul.f32 %v2081, %v2080
          %v2083 = vmul.f32 %v2082, %v2081
          %v2084 = vmul.f32 0.5, %v2083
          %v2085 = vsub.f32 1.5, %v2084
          %v2086 = vmul.f32 %v2081, %v2085
          %vm2087 = vweird.f32 %v2080
          %vm2088 = vweird.f32 %v2081
          %vm2089 = vmor %vm2087, %vm2088
          %v2090 = vsel %vm2089, %v2081, %v2086
          %v2091 = vmul.f32 %v2074, %v2090
          %2092 = vst.msk [vmem:[%s462] sm:$0x1] %vm2076, %v2091
        $region68: #{boq_forward.1} parent=59 // pred_fallthru
          _
        %s2093 = sand.u32 %s286, 1
        %s2094 = scalar_lea.sflag [#allocation5], %s2093
        %s2095 = sand.u32 %s286, 1
        %s2096 = scalar_lea.vmem [#allocation4], %s2095
        %p2097 = scmp.lt.s32.totalorder %s30, 1
        %s2098 = scalar_select %p2097, %s30, 1
        %p2099 = scmp.lt.s32.totalorder %s31, 1
        %s2100 = scalar_select %p2099, %s31, 1
        %s2101 = smul.addr %s2098, 2
        %s2102 = sadd.s32 %s2100, %s2101
        %s2103 = smul.addr %s2102, 8
        %s2104 = scalar_lea.vmem %s11, %s2103
        // Predicated region
        $region69: #{boq_forward.1} parent=59 // pred_check
          %p2105 = pneg %p296
        $region70: #{boq_forward.1} parent=59 // pred_check_branch
          %2107 = sbr.rel (%p2105) target = $region72
        $region71: #{boq_forward.1} parent=59 // pred_region
          %2109 = vsyncadd %s2094, 0
          %s2110 = scalar_lea.hbm %s10, %s30
          %s2112 = sshll.u32 %s2096, 4
          %s2113 = int_to_ptr.vmem [resolvable:$true] %s2112
          %s2114 = sshll.u32 %s2110, 4
          %s2115 = int_to_ptr.hbm [resolvable:$true] %s2114
          %2117 = dma.vmem_to_hbm [thread:$0]  %s2113, 16, %s2115, %s2094
        $region72: #{boq_forward.1} parent=59 // pred_fallthru
          _
        // Predicated region
        $region73: #{boq_forward.1} parent=59 // pred_check
          %p2118 = pneg %p324
        $region74: #{boq_forward.1} parent=59 // pred_check_branch
          %2120 = sbr.rel (%p2118) target = $region76
        $region75: #{boq_forward.1} parent=59 // pred_region
          _
        $region76: #{boq_forward.1} parent=59 // pred_fallthru
          _
      $region60: #{boq_forward.1} parent=5 // pred_fallthru
        _
      %p2121 = scmp.le.s32.totalorder 2, %s21
      // Predicated region
      $region77: #{boq_forward.1} parent=5 // pred_check
        %p2122 = pneg %p2121
      $region78: #{boq_forward.1} parent=5 // pred_check_branch
        %2124 = sbr.rel (%p2122) target = $region80
      $region79: #{boq_forward.1} parent=5 // pred_region
        %s2125 = ssub.s32 %s21, 2
        // Predicated region
        $region81: #{boq_forward.1} parent=79 // pred_check
          %p2126 = pneg %p302
        $region82: #{boq_forward.1} parent=79 // pred_check_branch
          %2128 = sbr.rel (%p2126) target = $region84
        $region83: #{boq_forward.1} parent=79 // pred_region
          %s2129 = sand.u32 %s287, 1
          %s2130 = scalar_lea.sflag [#allocation5], %s2129
          %s2131 = sand.u32 %s287, 1
          %s2132 = scalar_lea.vmem [#allocation4], %s2131
          %2134 = dma.done %s2130, 16
        $region84: #{boq_forward.1} parent=79 // pred_fallthru
          _
        // Predicated region
        $region85: #{boq_forward.1} parent=79 // pred_check
          %p2135 = pneg %p330
        $region86: #{boq_forward.1} parent=79 // pred_check_branch
          %2137 = sbr.rel (%p2135) target = $region88
        $region87: #{boq_forward.1} parent=79 // pred_region
          %p2138 = scmp.lt.s32.totalorder %s32, 1
          %s2139 = scalar_select %p2138, %s32, 1
          %p2140 = scmp.lt.s32.totalorder %s33, 1
          %s2141 = scalar_select %p2140, %s33, 1
          %s2142 = smul.addr %s2139, 2
          %s2143 = sadd.s32 %s2141, %s2142
          %s2144 = smul.addr %s2143, 8
          %s2145 = scalar_lea.vmem %s11, %s2144
        $region88: #{boq_forward.1} parent=79 // pred_fallthru
          _
      $region80: #{boq_forward.1} parent=5 // pred_fallthru
        _
    $region6: #{boq_forward.1} parent=1 // loop_footer
      %s25 = sadd.s32 1, %s21
    $region7: #{boq_forward.1} parent=1 // loop_footer_branch
      %20 = sbr.rel target = $region3
    $region8: #{boq_forward.1} parent=1 // loop_exit
      _
    %2146 = vsyncpa [#allocation5], 1
    %s2147 = scalar_lea.sflag [#allocation5], 1
    %2148 = vsyncpa %s2147, 1

</llo_original>
